<compile_context>
chip_gen: v5e
topology: v5e:2x2
jax: 0.10.0
libtpu: 0.0.40
codegen_flags: <defaults>
</compile_context>

<pallas_src>
import jax
import jax.numpy as jnp
from jax import lax
from jax.experimental import pallas as pl
from jax.experimental.pallas import tpu as pltpu

_LOG2E = 1.4426950408889634


def _flash_attn_kernel(q_ref, k_ref, v_ref, o_ref, qs_sc, m_sc, l_sc, acc_sc):
    """Refs: q (1, tq, D), k/v (1, tk, D), o (1, tq, D).

    Scratch (resident across the KV grid axis for the current (bh, q-tile)):
      qs_sc  (tq, D) compute dtype : pre-scaled, pre-cast q tile
      m_sc   (tq, 1) f32           : running max (base-2 domain)
      l_sc   (tq, 1) f32           : running sum of exp2
      acc_sc (tq, D) f32           : output accumulator
    """
    kv = pl.program_id(2)
    d = q_ref.shape[-1]

    @pl.when(kv == 0)
    def _():
        # Fold 1/sqrt(D) and log2(e) into q once per q tile; cast to the MXU
        # compute dtype once instead of every KV step.
        scale = _LOG2E * (float(d) ** -0.5)
        qs_sc[...] = (q_ref[0] * scale).astype(qs_sc.dtype)
        m_sc[...] = jnp.full_like(m_sc, -jnp.inf)
        l_sc[...] = jnp.zeros_like(l_sc)
        acc_sc[...] = jnp.zeros_like(acc_sc)

    q = qs_sc[...]                              # (tq, D) bf16 (or native)
    k = k_ref[0].astype(qs_sc.dtype)            # (tk, D)
    v = v_ref[0].astype(qs_sc.dtype)            # (tk, D)

    # Scores in the base-2 domain: contract last dim of both operands
    # (no explicit K transpose -> no XLU vxpose / extra VMEM copy).
    s = lax.dot_general(q, k, (((1,), (1,)), ((), ())),
                        preferred_element_type=jnp.float32)       # (tq, tk)

    m_prev = m_sc[...]                                            # (tq, 1)
    m_new = jnp.maximum(m_prev, jnp.max(s, axis=-1, keepdims=True))
    alpha = jnp.exp2(m_prev - m_new)                              # (tq, 1)
    # f32 EUP exp2; on v6e a bf16 argument would halve EUP pressure but the
    # f32 path keeps the row-sum / numerics simple.
    p = jnp.exp2(s - m_new)                                       # (tq, tk) f32

    l_sc[...] = alpha * l_sc[...] + jnp.sum(p, axis=-1, keepdims=True)
    acc_sc[...] = alpha * acc_sc[...] + lax.dot_general(
        p.astype(v.dtype), v, (((1,), (0,)), ((), ())),
        preferred_element_type=jnp.float32)                       # (tq, D)
    m_sc[...] = m_new

    @pl.when(kv == pl.num_programs(2) - 1)
    def _():
        # Exact divide: runs once per q tile, negligible cost, tight numerics.
        o_ref[0] = (acc_sc[...] / l_sc[...]).astype(o_ref.dtype)


def _vmem_limit_bytes():
    """~85% of physical VMEM (per-generation): ~54 MiB v7x, ~108 MiB v5e/v6e."""
    try:
        cap = int(pltpu.get_tpu_info().vmem_capacity_bytes)
    except Exception:
        cap = 64 * 1024 * 1024  # conservative fallback (v7x-sized)
    return int(cap * 0.85)


def base_attention(q, k, v, *, tq=512, tk=512, kv_buffers=2):
    """q, k, v: (BH, S, D) arrays. Returns (BH, S, D) attention output."""
    BH, S, D = q.shape
    tq = min(tq, S)
    tk = min(tk, S)
    assert S % tq == 0 and S % tk == 0, "seq len must be divisible by tiles"

    # bf16 is the MXU fast path on every generation; f32 inputs are cast
    # (accumulation stays f32).  Lower-precision inputs pass through.
    compute_dtype = jnp.bfloat16 if q.dtype == jnp.float32 else q.dtype

    grid = (BH, S // tq, S // tk)

    q_spec = pl.BlockSpec((1, tq, D), lambda b, qi, ki: (b, qi, 0))
    if kv_buffers > 2:
        # Deeper KV pipelining (useful if KV DMA is exposed, e.g. on v5e).
        kv_spec = pl.BlockSpec((1, tk, D), lambda b, qi, ki: (b, ki, 0),
                               pipeline_mode=pl.Buffered(kv_buffers))
    else:
        kv_spec = pl.BlockSpec((1, tk, D), lambda b, qi, ki: (b, ki, 0))
    o_spec = pl.BlockSpec((1, tq, D), lambda b, qi, ki: (b, qi, 0))

    return pl.pallas_call(
        _flash_attn_kernel,
        out_shape=jax.ShapeDtypeStruct((BH, S, D), q.dtype),
        grid_spec=pltpu.PrefetchScalarGridSpec(
            num_scalar_prefetch=0,
            grid=grid,
            in_specs=[q_spec, kv_spec, kv_spec],
            out_specs=o_spec,
            scratch_shapes=[
                pltpu.VMEM((tq, D), compute_dtype),  # pre-scaled q tile
                pltpu.VMEM((tq, 1), jnp.float32),    # running max m (base-2)
                pltpu.VMEM((tq, 1), jnp.float32),    # running sum l
                pltpu.VMEM((tq, D), jnp.float32),    # output accumulator
            ],
        ),
        compiler_params=pltpu.CompilerParams(
            dimension_semantics=("parallel", "parallel", "arbitrary"),
            vmem_limit_bytes=_vmem_limit_bytes(),
        ),
    )(q, k, v)


def _reference(q, k, v):
    scale = 1.0 / jnp.sqrt(jnp.float32(q.shape[-1]))
    s = jnp.einsum("bqd,bkd->bqk", q.astype(jnp.float32),
                   k.astype(jnp.float32)) * scale
    p = jax.nn.softmax(s, axis=-1)
    return jnp.einsum("bqk,bkd->bqd", p, v.astype(jnp.float32)).astype(q.dtype)


if __name__ == "__main__":
    # Small deterministic inputs: batch=2, heads=2 -> BH=4.
    # seq=512 with tq=tk=256 so both the q-tile and KV grid axes iterate
    # (exercises the init / carry / finalize paths); head_dim=128 keeps the
    # output lane-dense.
    key = jax.random.PRNGKey(0)
    kq, kk, kvk = jax.random.split(key, 3)
    BH, S, D = 4, 512, 128
    q = jax.random.normal(kq, (BH, S, D), dtype=jnp.float32)
    k = jax.random.normal(kk, (BH, S, D), dtype=jnp.float32)
    v = jax.random.normal(kvk, (BH, S, D), dtype=jnp.float32)

    out = base_attention(q, k, v, tq=256, tk=256)
    out = jax.block_until_ready(out)

    ref = jax.block_until_ready(_reference(q, k, v))
    assert out.shape == (BH, S, D)
    # Tolerance accounts for the bf16 MXU fast path (f32 inputs are cast to
    # bf16 for the matmuls; accumulation stays f32).
    assert jnp.allclose(out, ref, atol=1e-2, rtol=1e-2), (
        float(jnp.max(jnp.abs(out - ref))))

    print("KERNEL_OK")
</pallas_src>

<mosaic_0001>
module attributes {stable_mosaic.version = 11 : i64} {
  func.func @_flash_attn_kernel(%arg0: i32, %arg1: i32, %arg2: i32, %arg3: memref<1x256x128xf32, #tpu.memory_space<vmem>>, %arg4: memref<1x256x128xf32, #tpu.memory_space<vmem>>, %arg5: memref<1x256x128xf32, #tpu.memory_space<vmem>>, %arg6: memref<1x256x128xf32, #tpu.memory_space<vmem>>, %arg7: memref<256x128xbf16, #tpu.memory_space<vmem>>, %arg8: memref<256x1xf32, #tpu.memory_space<vmem>>, %arg9: memref<256x1xf32, #tpu.memory_space<vmem>>, %arg10: memref<256x128xf32, #tpu.memory_space<vmem>>) attributes {dimension_semantics = [#tpu.dimension_semantics<parallel>, #tpu.dimension_semantics<parallel>, #tpu.dimension_semantics<arbitrary>], iteration_bounds = array<i64: 4, 2, 2>, scalar_prefetch = 0 : i64, scratch_operands = 4 : i64, tpu.core_type = #tpu.core_type<tc>, window_params = [{transform_indices = @transform_0, window_bounds = array<i64: 1, 256, 128>}, {transform_indices = @transform_1, window_bounds = array<i64: 1, 256, 128>}, {transform_indices = @transform_2, window_bounds = array<i64: 1, 256, 128>}, {transform_indices = @transform_3, window_bounds = array<i64: 1, 256, 128>}]} {
    %c0_i32 = arith.constant 0 : i32
    %0 = arith.cmpi eq, %arg2, %c0_i32 : i32
    %1 = arith.extui %0 : i1 to i32
    %c0_i32_0 = arith.constant 0 : i32
    %2 = arith.cmpi ne, %1, %c0_i32_0 : i32
    scf.if %2 {
      %c0_24 = arith.constant 0 : index
      %c0_25 = arith.constant 0 : index
      %c0_26 = arith.constant 0 : index
      %37 = vector.load %arg3[%c0_24, %c0_25, %c0_26] : memref<1x256x128xf32, #tpu.memory_space<vmem>>, vector<1x256x128xf32>
      %38 = vector.shape_cast %37 : vector<1x256x128xf32> to vector<256x128xf32>
      %cst_27 = arith.constant 0.127517432 : f32
      %39 = vector.broadcast %cst_27 : f32 to vector<256x128xf32>
      %40 = arith.mulf %38, %39 : vector<256x128xf32>
      %41 = arith.truncf %40 : vector<256x128xf32> to vector<256x128xbf16>
      %c0_28 = arith.constant 0 : index
      %c0_29 = arith.constant 0 : index
      %42 = vector.load %arg7[%c0_28, %c0_29] : memref<256x128xbf16, #tpu.memory_space<vmem>>, vector<256x128xbf16>
      tpu.vector_store %arg7[%c0_28, %c0_29], %41 {strides = array<i32>} : memref<256x128xbf16, #tpu.memory_space<vmem>>, vector<256x128xbf16>,
      %cst_30 = arith.constant 0xFF800000 : f32
      %43 = vector.broadcast %cst_30 : f32 to vector<256x1xf32>
      %c0_31 = arith.constant 0 : index
      %c0_32 = arith.constant 0 : index
      %44 = vector.load %arg8[%c0_31, %c0_32] : memref<256x1xf32, #tpu.memory_space<vmem>>, vector<256x1xf32>
      tpu.vector_store %arg8[%c0_31, %c0_32], %43 {strides = array<i32>} : memref<256x1xf32, #tpu.memory_space<vmem>>, vector<256x1xf32>,
      %cst_33 = arith.constant 0.000000e+00 : f32
      %45 = vector.broadcast %cst_33 : f32 to vector<256x1xf32>
      %c0_34 = arith.constant 0 : index
      %c0_35 = arith.constant 0 : index
      %46 = vector.load %arg9[%c0_34, %c0_35] : memref<256x1xf32, #tpu.memory_space<vmem>>, vector<256x1xf32>
      tpu.vector_store %arg9[%c0_34, %c0_35], %45 {strides = array<i32>} : memref<256x1xf32, #tpu.memory_space<vmem>>, vector<256x1xf32>,
      %cst_36 = arith.constant 0.000000e+00 : f32
      %47 = vector.broadcast %cst_36 : f32 to vector<256x128xf32>
      %c0_37 = arith.constant 0 : index
      %c0_38 = arith.constant 0 : index
      %48 = vector.load %arg10[%c0_37, %c0_38] : memref<256x128xf32, #tpu.memory_space<vmem>>, vector<256x128xf32>
      tpu.vector_store %arg10[%c0_37, %c0_38], %47 {strides = array<i32>} : memref<256x128xf32, #tpu.memory_space<vmem>>, vector<256x128xf32>,
    } else {
    }
    %c0 = arith.constant 0 : index
    %c0_1 = arith.constant 0 : index
    %3 = vector.load %arg7[%c0, %c0_1] : memref<256x128xbf16, #tpu.memory_space<vmem>>, vector<256x128xbf16>
    %c0_2 = arith.constant 0 : index
    %c0_3 = arith.constant 0 : index
    %c0_4 = arith.constant 0 : index
    %4 = vector.load %arg4[%c0_2, %c0_3, %c0_4] : memref<1x256x128xf32, #tpu.memory_space<vmem>>, vector<1x256x128xf32>
    %5 = vector.shape_cast %4 : vector<1x256x128xf32> to vector<256x128xf32>
    %6 = arith.truncf %5 : vector<256x128xf32> to vector<256x128xbf16>
    %c0_5 = arith.constant 0 : index
    %c0_6 = arith.constant 0 : index
    %c0_7 = arith.constant 0 : index
    %7 = vector.load %arg5[%c0_5, %c0_6, %c0_7] : memref<1x256x128xf32, #tpu.memory_space<vmem>>, vector<1x256x128xf32>
    %8 = vector.shape_cast %7 : vector<1x256x128xf32> to vector<256x128xf32>
    %9 = arith.truncf %8 : vector<256x128xf32> to vector<256x128xbf16>
    %cst = arith.constant dense<0.000000e+00> : vector<256x256xf32>
    %10 = tpu.matmul %3, %6, %cst {dimension_numbers = #tpu.dot_dimension_numbers<[1], [1], [0], [0], [0, 0, 1, 0], [], []>} : vector<256x128xbf16>, vector<256x128xbf16>, vector<256x256xf32> -> vector<256x256xf32>
    %c0_8 = arith.constant 0 : index
    %c0_9 = arith.constant 0 : index
    %11 = vector.load %arg8[%c0_8, %c0_9] : memref<256x1xf32, #tpu.memory_space<vmem>>, vector<256x1xf32>
    %cst_10 = arith.constant dense<0xFF800000> : vector<256xf32>
    %12 = vector.multi_reduction <maximumf>, %10, %cst_10 [1] : vector<256x256xf32> to vector<256xf32>
    %13 = vector.shape_cast %12 : vector<256xf32> to vector<256x1xf32>
    %14 = arith.maximumf %11, %13 : vector<256x1xf32>
    %15 = arith.subf %11, %14 : vector<256x1xf32>
    %16 = math.exp2 %15 : vector<256x1xf32>
    %17 = vector.broadcast %14 : vector<256x1xf32> to vector<256x256xf32>
    %18 = arith.subf %10, %17 : vector<256x256xf32>
    %19 = math.exp2 %18 : vector<256x256xf32>
    %c0_11 = arith.constant 0 : index
    %c0_12 = arith.constant 0 : index
    %20 = vector.load %arg9[%c0_11, %c0_12] : memref<256x1xf32, #tpu.memory_space<vmem>>, vector<256x1xf32>
    %21 = arith.mulf %16, %20 : vector<256x1xf32>
    %cst_13 = arith.constant dense<0.000000e+00> : vector<256xf32>
    %22 = vector.multi_reduction <add>, %19, %cst_13 [1] : vector<256x256xf32> to vector<256xf32>
    %23 = vector.shape_cast %22 : vector<256xf32> to vector<256x1xf32>
    %24 = arith.addf %21, %23 : vector<256x1xf32>
    %c0_14 = arith.constant 0 : index
    %c0_15 = arith.constant 0 : index
    %25 = vector.load %arg9[%c0_14, %c0_15] : memref<256x1xf32, #tpu.memory_space<vmem>>, vector<256x1xf32>
    tpu.vector_store %arg9[%c0_14, %c0_15], %24 {strides = array<i32>} : memref<256x1xf32, #tpu.memory_space<vmem>>, vector<256x1xf32>,
    %c0_16 = arith.constant 0 : index
    %c0_17 = arith.constant 0 : index
    %26 = vector.load %arg10[%c0_16, %c0_17] : memref<256x128xf32, #tpu.memory_space<vmem>>, vector<256x128xf32>
    %27 = vector.broadcast %16 : vector<256x1xf32> to vector<256x128xf32>
    %28 = arith.mulf %27, %26 : vector<256x128xf32>
    %29 = arith.truncf %19 : vector<256x256xf32> to vector<256x256xbf16>
    %cst_18 = arith.constant dense<0.000000e+00> : vector<256x128xf32>
    %30 = tpu.matmul %29, %9, %cst_18 {dimension_numbers = #tpu.dot_dimension_numbers<[1], [0], [0], [1], [0, 0, 1, 1], [], []>} : vector<256x256xbf16>, vector<256x128xbf16>, vector<256x128xf32> -> vector<256x128xf32>
    %31 = arith.addf %28, %30 : vector<256x128xf32>
    %c0_19 = arith.constant 0 : index
    %c0_20 = arith.constant 0 : index
    %32 = vector.load %arg10[%c0_19, %c0_20] : memref<256x128xf32, #tpu.memory_space<vmem>>, vector<256x128xf32>
    tpu.vector_store %arg10[%c0_19, %c0_20], %31 {strides = array<i32>} : memref<256x128xf32, #tpu.memory_space<vmem>>, vector<256x128xf32>,
    %c0_21 = arith.constant 0 : index
    %c0_22 = arith.constant 0 : index
    %33 = vector.load %arg8[%c0_21, %c0_22] : memref<256x1xf32, #tpu.memory_space<vmem>>, vector<256x1xf32>
    tpu.vector_store %arg8[%c0_21, %c0_22], %14 {strides = array<i32>} : memref<256x1xf32, #tpu.memory_space<vmem>>, vector<256x1xf32>,
    %c1_i32 = arith.constant 1 : i32
    %34 = arith.cmpi eq, %arg2, %c1_i32 : i32
    %35 = arith.extui %34 : i1 to i32
    %c0_i32_23 = arith.constant 0 : i32
    %36 = arith.cmpi ne, %35, %c0_i32_23 : i32
    scf.if %36 {
      %c0_24 = arith.constant 0 : index
      %c0_25 = arith.constant 0 : index
      %37 = vector.load %arg10[%c0_24, %c0_25] : memref<256x128xf32, #tpu.memory_space<vmem>>, vector<256x128xf32>
      %c0_26 = arith.constant 0 : index
      %c0_27 = arith.constant 0 : index
      %38 = vector.load %arg9[%c0_26, %c0_27] : memref<256x1xf32, #tpu.memory_space<vmem>>, vector<256x1xf32>
      %39 = vector.broadcast %38 : vector<256x1xf32> to vector<256x128xf32>
      %40 = arith.divf %37, %39 : vector<256x128xf32>
      %c0_28 = arith.constant 0 : index
      %c0_29 = arith.constant 0 : index
      %c0_30 = arith.constant 0 : index
      %41 = vector.load %arg6[%c0_28, %c0_29, %c0_30] : memref<1x256x128xf32, #tpu.memory_space<vmem>>, vector<1x256x128xf32>
      %42 = vector.shape_cast %41 : vector<1x256x128xf32> to vector<256x128xf32>
      %43 = vector.shape_cast %40 : vector<256x128xf32> to vector<1x256x128xf32>
      tpu.vector_store %arg6[%c0_28, %c0_29, %c0_30], %43 {strides = array<i32>} : memref<1x256x128xf32, #tpu.memory_space<vmem>>, vector<1x256x128xf32>,
    } else {
    }
    return
  }
  func.func @transform_0(%arg0: i32, %arg1: i32, %arg2: i32) -> (i32, i32, i32) {
    %c0_i32 = arith.constant 0 : i32
    %c0_i32_0 = arith.constant 0 : i32
    return %arg0, %arg1, %c0_i32 : i32, i32, i32
  }
  func.func @transform_1(%arg0: i32, %arg1: i32, %arg2: i32) -> (i32, i32, i32) {
    %c0_i32 = arith.constant 0 : i32
    %c0_i32_0 = arith.constant 0 : i32
    return %arg0, %arg2, %c0_i32 : i32, i32, i32
  }
  func.func @transform_2(%arg0: i32, %arg1: i32, %arg2: i32) -> (i32, i32, i32) {
    %c0_i32 = arith.constant 0 : i32
    %c0_i32_0 = arith.constant 0 : i32
    return %arg0, %arg2, %c0_i32 : i32, i32, i32
  }
  func.func @transform_3(%arg0: i32, %arg1: i32, %arg2: i32) -> (i32, i32, i32) {
    %c0_i32 = arith.constant 0 : i32
    %c0_i32_0 = arith.constant 0 : i32
    return %arg0, %arg1, %c0_i32 : i32, i32, i32
  }
}

</mosaic_0001>

<llo_original>
// kernel: tpu_custom_call.1
$region0: #{tpu_custom_call.1}
  #allocation0 [shape = 'u32[]', space=smem, size = 0x4, offset = 0x4, fixed_abs, tag = 'smem constant byte address 0x4 - core index']
  #allocation1 [shape = 'u32[72,128]{1,0:T(1,128)}', space=vmem, size = 0x9000, scoped, tag = 'internal scratch']
  #allocation2 [shape = 'bf16[256,128]{1,0:T(8,128)(2,1)}', space=vmem, size = 0x10000, scoped, tag = 'scratch operand']
  #allocation3 [shape = 'f32[256,1]{1,0:T(8,128)}', space=vmem, size = 0x20000, scoped, tag = 'scratch operand']
  #allocation4 [shape = 'f32[256,1]{1,0:T(8,128)}', space=vmem, size = 0x20000, scoped, tag = 'scratch operand']
  #allocation5 [shape = 'f32[256,128]{1,0:T(8,128)}', space=vmem, size = 0x20000, scoped, tag = 'scratch operand']
  %s0 = inlined_call_operand.hbm [shape: f32[4,512,128], index: 0, kind: input, shape index: {}]
  %s1 = inlined_call_operand.hbm [shape: f32[4,512,128], index: 1, kind: input, shape index: {}]
  %s2 = inlined_call_operand.hbm [shape: f32[4,512,128], index: 2, kind: input, shape index: {}]
  %s3 = inlined_call_operand.hbm [shape: f32[4,512,128], index: 3, kind: output, shape index: {}]
  %s4 = sld [smem:[#allocation0]]
  $region65: #{tpu_custom_call.1} parent=0
    _
  %s6 = ssub.s32 1, %s4
  %s7 = scalar_select 0, %s6, %s4
  $region1: #{tpu_custom_call.1} parent=0
    #allocation6 [shape = 'u8[262144]{0}', space=vmem, size = 0x40000, scoped, tag = 'input window, operand 0']
    #allocation7 [shape = 's32[2]{0}', space=sflag, size = 0x8, scoped, tag = 'scoped memory for tpu_custom_call.1']
    #allocation8 [shape = 's32[2]{0}', space=sflag, size = 0x8, scoped, tag = 'scoped memory for tpu_custom_call.1']
    #allocation9 [shape = 'u8[262144]{0}', space=vmem, size = 0x40000, scoped, tag = 'input window, operand 1']
    #allocation10 [shape = 's32[2]{0}', space=sflag, size = 0x8, scoped, tag = 'scoped memory for tpu_custom_call.1']
    #allocation11 [shape = 'u8[262144]{0}', space=vmem, size = 0x40000, scoped, tag = 'input window, operand 2']
    #allocation12 [shape = 'u8[262144]{0}', space=vmem, size = 0x40000, scoped, tag = 'output window, operand 0']
    %8 = vsyncpa [#allocation7], 0
    %s9 = scalar_lea.sflag [#allocation7], 1
    %10 = vsyncpa %s9, 0
    %11 = vsyncpa [#allocation10], 0
    %s12 = scalar_lea.sflag [#allocation10], 1
    %13 = vsyncpa %s12, 0
    %14 = vsyncpa [#allocation8], 0
    %s15 = scalar_lea.sflag [#allocation8], 1
    %16 = vsyncpa %s15, 0
    loop: start=0, step=1, limit=18
    $region2: #{tpu_custom_call.1} parent=1 // loop_pre_header
      _
    $region3: #{tpu_custom_call.1} parent=1 // loop_header
      %s18 = sphi 0, %s22
      %p19 = scmp.ge.s32.totalorder %s18, 18
      %s25 = sphi 0, %s44
      %s26 = sphi 0, %s40
      %s27 = sphi 0, %s36
      %s28 = sphi 0, %s25
      %s29 = sphi 0, %s26
      %s30 = sphi 0, %s27
      %s31 = sphi 0, %s28
      %s32 = sphi 0, %s29
      %s33 = sphi 0, %s30
      %s49 = sphi 0, %s51
      %s52 = sphi 0, %s49
      %s53 = sphi 0, %s52
      %s69 = sphi 0, %s53
      %s77 = sphi 0, %s79
      %s80 = sphi 0, %s77
      %s81 = sphi 0, %s80
      %s97 = sphi 0, %s81
      %s105 = sphi 0, %s107
      %s108 = sphi 0, %s105
      %s109 = sphi 0, %s108
      %s125 = sphi 0, %s109
      %s133 = sphi 0, %s135
      %s136 = sphi 0, %s133
      %s137 = sphi 0, %s136
      %s153 = sphi 0, %s137
    $region4: #{tpu_custom_call.1} parent=1 // loop_header_branch
      %21 = sbr.rel (%p19) target = $region8
    $region5: #{tpu_custom_call.1} parent=1 // loop_body
      %s23 = ssub.s32 %s18, 1
      %s24 = ssub.s32 %s18, 2
      %s34 = sadd.s32 1, %s27
      %p35 = scmp.ge.s32.totalorder %s34, 2
      %s36 = scalar_select %p35, 0, %s34
      %s37 = sadd.s32 1, %s26
      %s38 = scalar_select %p35, %s37, %s26
      %p39 = scmp.ge.s32.totalorder %s38, 2
      %s40 = scalar_select %p39, 0, %s38
      %s41 = sadd.s32 1, %s25
      %s42 = scalar_select %p39, %s41, %s25
      %p43 = scmp.ge.s32.totalorder %s42, 4
      %s44 = scalar_select %p43, 0, %s42
      %s45 = ssub.s32 %s25, %s44
      %s46 = ssub.s32 %s26, %s40
      %s47 = sor.u32 %s45, %s46
      %p48 = scmp.eq.s32.totalorder %s47, 0
      %s50 = sadd.s32 %s49, 1
      %s51 = scalar_select %p48, %s49, %s50
      %p54 = pneg %p48
      %p55 = scmp.eq.s32.totalorder %s18, 15
      %p56 = por %p54, %p55
      %p57 = scmp.ne.s32.totalorder %s49, %s52
      %p58 = scmp.eq.s32.totalorder %s18, 0
      %p59 = por %p57, %p58
      %p60 = scmp.ne.s32.totalorder %s49, %s52
      %p61 = scmp.eq.s32.totalorder %s23, 15
      %p62 = por %p60, %p61
      %p63 = scmp.ne.s32.totalorder %s52, %s53
      %p64 = scmp.eq.s32.totalorder %s23, 0
      %p65 = por %p63, %p64
      %p66 = scmp.ne.s32.totalorder %s52, %s53
      %p67 = scmp.eq.s32.totalorder %s24, 15
      %p68 = por %p66, %p67
      %p70 = scmp.ne.s32.totalorder %s53, %s69
      %p71 = scmp.eq.s32.totalorder %s24, 0
      %p72 = por %p70, %p71
      %s73 = ssub.s32 %s25, %s44
      %s74 = ssub.s32 %s27, %s36
      %s75 = sor.u32 %s73, %s74
      %p76 = scmp.eq.s32.totalorder %s75, 0
      %s78 = sadd.s32 %s77, 1
      %s79 = scalar_select %p76, %s77, %s78
      %p82 = pneg %p76
      %p83 = scmp.eq.s32.totalorder %s18, 15
      %p84 = por %p82, %p83
      %p85 = scmp.ne.s32.totalorder %s77, %s80
      %p86 = scmp.eq.s32.totalorder %s18, 0
      %p87 = por %p85, %p86
      %p88 = scmp.ne.s32.totalorder %s77, %s80
      %p89 = scmp.eq.s32.totalorder %s23, 15
      %p90 = por %p88, %p89
      %p91 = scmp.ne.s32.totalorder %s80, %s81
      %p92 = scmp.eq.s32.totalorder %s23, 0
      %p93 = por %p91, %p92
      %p94 = scmp.ne.s32.totalorder %s80, %s81
      %p95 = scmp.eq.s32.totalorder %s24, 15
      %p96 = por %p94, %p95
      %p98 = scmp.ne.s32.totalorder %s81, %s97
      %p99 = scmp.eq.s32.totalorder %s24, 0
      %p100 = por %p98, %p99
      %s101 = ssub.s32 %s25, %s44
      %s102 = ssub.s32 %s27, %s36
      %s103 = sor.u32 %s101, %s102
      %p104 = scmp.eq.s32.totalorder %s103, 0
      %s106 = sadd.s32 %s105, 1
      %s107 = scalar_select %p104, %s105, %s106
      %p110 = pneg %p104
      %p111 = scmp.eq.s32.totalorder %s18, 15
      %p112 = por %p110, %p111
      %p113 = scmp.ne.s32.totalorder %s105, %s108
      %p114 = scmp.eq.s32.totalorder %s18, 0
      %p115 = por %p113, %p114
      %p116 = scmp.ne.s32.totalorder %s105, %s108
      %p117 = scmp.eq.s32.totalorder %s23, 15
      %p118 = por %p116, %p117
      %p119 = scmp.ne.s32.totalorder %s108, %s109
      %p120 = scmp.eq.s32.totalorder %s23, 0
      %p121 = por %p119, %p120
      %p122 = scmp.ne.s32.totalorder %s108, %s109
      %p123 = scmp.eq.s32.totalorder %s24, 15
      %p124 = por %p122, %p123
      %p126 = scmp.ne.s32.totalorder %s109, %s125
      %p127 = scmp.eq.s32.totalorder %s24, 0
      %p128 = por %p126, %p127
      %s129 = ssub.s32 %s25, %s44
      %s130 = ssub.s32 %s26, %s40
      %s131 = sor.u32 %s129, %s130
      %p132 = scmp.eq.s32.totalorder %s131, 0
      %s134 = sadd.s32 %s133, 1
      %s135 = scalar_select %p132, %s133, %s134
      %p138 = pneg %p132
      %p139 = scmp.eq.s32.totalorder %s18, 15
      %p140 = por %p138, %p139
      %p141 = scmp.ne.s32.totalorder %s133, %s136
      %p142 = scmp.eq.s32.totalorder %s18, 0
      %p143 = por %p141, %p142
      %p144 = scmp.ne.s32.totalorder %s133, %s136
      %p145 = scmp.eq.s32.totalorder %s23, 15
      %p146 = por %p144, %p145
      %p147 = scmp.ne.s32.totalorder %s136, %s137
      %p148 = scmp.eq.s32.totalorder %s23, 0
      %p149 = por %p147, %p148
      %p150 = scmp.ne.s32.totalorder %s136, %s137
      %p151 = scmp.eq.s32.totalorder %s24, 15
      %p152 = por %p150, %p151
      %p154 = scmp.ne.s32.totalorder %s137, %s153
      %p155 = scmp.eq.s32.totalorder %s24, 0
      %p156 = por %p154, %p155
      %p157 = scmp.le.s32.totalorder 1, %s18
      %p158 = scmp.lt.s32.totalorder %s18, 17
      %p159 = pnand %p157, %p158
      %p160 = pneg %p159
      // Predicated region
      $region9: #{tpu_custom_call.1} parent=5 // pred_check
        _
      $region10: #{tpu_custom_call.1} parent=5 // pred_check_branch
        %162 = sbr.rel (%p159) target = $region12
      $region11: #{tpu_custom_call.1} parent=5 // pred_region
        %s163 = ssub.s32 %s18, 1
      $region12: #{tpu_custom_call.1} parent=5 // pred_fallthru
        _
      %p164 = scmp.lt.s32.totalorder %s18, 16
      // Predicated region
      $region13: #{tpu_custom_call.1} parent=5 // pred_check
        %p165 = pneg %p164
      $region14: #{tpu_custom_call.1} parent=5 // pred_check_branch
        %167 = sbr.rel (%p165) target = $region16
      $region15: #{tpu_custom_call.1} parent=5 // pred_region
        // Predicated region
        $region17: #{tpu_custom_call.1} parent=15 // pred_check
          %p168 = pneg %p59
        $region18: #{tpu_custom_call.1} parent=15 // pred_check_branch
          %170 = sbr.rel (%p168) target = $region20
        $region19: #{tpu_custom_call.1} parent=15 // pred_region
          %s171 = sand.u32 %s49, 1
          %s172 = scalar_lea.sflag [#allocation7], %s171
          %s173 = sand.u32 %s49, 1
          %s174 = smul.addr %s173, 256
          %s175 = scalar_lea.vmem [#allocation6], %s174
          %s176 = smul.u32 32, %s26
          %178 = vsyncadd %s172, 0
          %s179 = smul.addr %s25, 64
          %s180 = sadd.s32 %s176, %s179
          %s181 = smul.addr %s180, 8
          %s182 = scalar_lea.hbm %s0, %s181
          %s183 = sshll.u32 %s182, 4
          %s184 = int_to_ptr.hbm [resolvable:$true] %s183
          %s185 = sshll.u32 %s175, 4
          %s186 = int_to_ptr.vmem [resolvable:$true] %s185
          %191 = dma.hbm_to_vmem [thread:$0]  %s184, 4096, %s186, %s172, 128, 128, 8
        $region20: #{tpu_custom_call.1} parent=15 // pred_fallthru
          _
        // Predicated region
        $region21: #{tpu_custom_call.1} parent=15 // pred_check
          %p192 = pneg %p87
        $region22: #{tpu_custom_call.1} parent=15 // pred_check_branch
          %194 = sbr.rel (%p192) target = $region24
        $region23: #{tpu_custom_call.1} parent=15 // pred_region
          %s195 = sand.u32 %s18, 1
          %s196 = scalar_lea.sflag [#allocation10], %s195
          %s197 = sand.u32 %s77, 1
          %s198 = smul.addr %s197, 256
          %s199 = scalar_lea.vmem [#allocation9], %s198
          %s200 = smul.u32 32, %s27
          %202 = vsyncadd %s196, 0
          %s203 = smul.addr %s25, 64
          %s204 = sadd.s32 %s200, %s203
          %s205 = smul.addr %s204, 8
          %s206 = scalar_lea.hbm %s1, %s205
          %s207 = sshll.u32 %s206, 4
          %s208 = int_to_ptr.hbm [resolvable:$true] %s207
          %s209 = sshll.u32 %s199, 4
          %s210 = int_to_ptr.vmem [resolvable:$true] %s209
          %215 = dma.hbm_to_vmem [thread:$0]  %s208, 4096, %s210, %s196, 128, 128, 8
        $region24: #{tpu_custom_call.1} parent=15 // pred_fallthru
          _
        // Predicated region
        $region25: #{tpu_custom_call.1} parent=15 // pred_check
          %p216 = pneg %p115
        $region26: #{tpu_custom_call.1} parent=15 // pred_check_branch
          %218 = sbr.rel (%p216) target = $region28
        $region27: #{tpu_custom_call.1} parent=15 // pred_region
          %s219 = sand.u32 %s18, 1
          %s220 = scalar_lea.sflag [#allocation10], %s219
          %s221 = sand.u32 %s105, 1
          %s222 = smul.addr %s221, 256
          %s223 = scalar_lea.vmem [#allocation11], %s222
          %s224 = smul.u32 32, %s27
          %226 = vsyncadd %s220, 0
          %s227 = smul.addr %s25, 64
          %s228 = sadd.s32 %s224, %s227
          %s229 = smul.addr %s228, 8
          %s230 = scalar_lea.hbm %s2, %s229
          %s231 = sshll.u32 %s230, 4
          %s232 = int_to_ptr.hbm [resolvable:$true] %s231
          %s233 = sshll.u32 %s223, 4
          %s234 = int_to_ptr.vmem [resolvable:$true] %s233
          %239 = dma.hbm_to_vmem [thread:$0]  %s232, 4096, %s234, %s220, 128, 128, 8
        $region28: #{tpu_custom_call.1} parent=15 // pred_fallthru
          _
      $region16: #{tpu_custom_call.1} parent=5 // pred_fallthru
        _
      %p240 = scmp.le.s32.totalorder 1, %s18
      %p241 = scmp.lt.s32.totalorder %s18, 17
      %p242 = pnand %p240, %p241
      %p243 = pneg %p242
      // Predicated region
      $region29: #{tpu_custom_call.1} parent=5 // pred_check
        _
      $region30: #{tpu_custom_call.1} parent=5 // pred_check_branch
        %245 = sbr.rel (%p242) target = $region32
      $region31: #{tpu_custom_call.1} parent=5 // pred_region
        %s246 = ssub.s32 %s18, 1
        %s247 = sand.u32 %s52, 1
        %s248 = scalar_lea.sflag [#allocation7], %s247
        %s249 = sand.u32 %s52, 1
        %s250 = smul.addr %s249, 256
        %s251 = scalar_lea.vmem [#allocation6], %s250
        // Predicated region
        $region33: #{tpu_custom_call.1} parent=31 // pred_check
          %p252 = pneg %p65
        $region34: #{tpu_custom_call.1} parent=31 // pred_check_branch
          %254 = sbr.rel (%p252) target = $region36
        $region35: #{tpu_custom_call.1} parent=31 // pred_region
          %256 = dma.done %s248, 4096
        $region36: #{tpu_custom_call.1} parent=31 // pred_fallthru
          _
        %s257 = sand.u32 %s23, 1
        %s258 = scalar_lea.sflag [#allocation10], %s257
        %s259 = sand.u32 %s80, 1
        %s260 = smul.addr %s259, 256
        %s261 = scalar_lea.vmem [#allocation9], %s260
        // Predicated region
        $region37: #{tpu_custom_call.1} parent=31 // pred_check
          %p262 = pneg %p93
        $region38: #{tpu_custom_call.1} parent=31 // pred_check_branch
          %264 = sbr.rel (%p262) target = $region40
        $region39: #{tpu_custom_call.1} parent=31 // pred_region
          %266 = dma.done %s258, 4096
        $region40: #{tpu_custom_call.1} parent=31 // pred_fallthru
          _
        %s267 = sand.u32 %s23, 1
        %s268 = scalar_lea.sflag [#allocation10], %s267
        %s269 = sand.u32 %s108, 1
        %s270 = smul.addr %s269, 256
        %s271 = scalar_lea.vmem [#allocation11], %s270
        // Predicated region
        $region41: #{tpu_custom_call.1} parent=31 // pred_check
          %p272 = pneg %p121
        $region42: #{tpu_custom_call.1} parent=31 // pred_check_branch
          %274 = sbr.rel (%p272) target = $region44
        $region43: #{tpu_custom_call.1} parent=31 // pred_region
          %276 = dma.done %s268, 4096
        $region44: #{tpu_custom_call.1} parent=31 // pred_fallthru
          _
        %s277 = sand.u32 %s52, 1
        %s278 = scalar_lea.sflag [#allocation7], %s277
        %s279 = sand.u32 %s52, 1
        %s280 = smul.addr %s279, 256
        %s281 = scalar_lea.vmem [#allocation6], %s280
        %p282 = pneg %p65
        %p283 = pneg %p62
        %s284 = sand.u32 %s23, 1
        %s285 = scalar_lea.sflag [#allocation10], %s284
        %s286 = sand.u32 %s80, 1
        %s287 = smul.addr %s286, 256
        %s288 = scalar_lea.vmem [#allocation9], %s287
        %p289 = pneg %p93
        %p290 = pneg %p90
        %s291 = sand.u32 %s23, 1
        %s292 = scalar_lea.sflag [#allocation10], %s291
        %s293 = sand.u32 %s108, 1
        %s294 = smul.addr %s293, 256
        %s295 = scalar_lea.vmem [#allocation11], %s294
        %p296 = pneg %p121
        %p297 = pneg %p118
        %p298 = pneg %p149
        %p299 = pneg %p146
        %s300 = sand.u32 %s136, 1
        %s301 = scalar_lea.sflag [#allocation8], %s300
        %s302 = sand.u32 %s136, 1
        %s303 = smul.addr %s302, 256
        %s304 = scalar_lea.vmem [#allocation12], %s303
        %s305 = smul.u32 32, %s29
        %s306 = smul.u32 32, %s30
        %s307 = smul.u32 32, %s30
        %s308 = smul.u32 32, %s29
        %p309 = scmp.eq.s32.totalorder %s30, 0
        // Predicated region
        $region45: #{tpu_custom_call.1} parent=31 // pred_check
          %p310 = pneg %p309
        $region46: #{tpu_custom_call.1} parent=31 // pred_check_branch
          %312 = sbr.rel (%p310) target = $region48
        $region47: #{tpu_custom_call.1} parent=31 // pred_region
          %v313 = vld [vmem:[%s251] sm:$0xff]
          %v314 = vld [vmem:[%s251 + $0x8] sm:$0xff]
          %v315 = vld [vmem:[%s251 + $0x10] sm:$0xff]
          %v316 = vld [vmem:[%s251 + $0x18] sm:$0xff]
          %v317 = vld [vmem:[%s251 + $0x20] sm:$0xff]
          %v318 = vld [vmem:[%s251 + $0x28] sm:$0xff]
          %v319 = vld [vmem:[%s251 + $0x30] sm:$0xff]
          %v320 = vld [vmem:[%s251 + $0x38] sm:$0xff]
          %v321 = vld [vmem:[%s251 + $0x40] sm:$0xff]
          %v322 = vld [vmem:[%s251 + $0x48] sm:$0xff]
          %v323 = vld [vmem:[%s251 + $0x50] sm:$0xff]
          %v324 = vld [vmem:[%s251 + $0x58] sm:$0xff]
          %v325 = vld [vmem:[%s251 + $0x60] sm:$0xff]
          %v326 = vld [vmem:[%s251 + $0x68] sm:$0xff]
          %v327 = vld [vmem:[%s251 + $0x70] sm:$0xff]
          %v328 = vld [vmem:[%s251 + $0x78] sm:$0xff]
          %v329 = vld [vmem:[%s251 + $0x80] sm:$0xff]
          %v330 = vld [vmem:[%s251 + $0x88] sm:$0xff]
          %v331 = vld [vmem:[%s251 + $0x90] sm:$0xff]
          %v332 = vld [vmem:[%s251 + $0x98] sm:$0xff]
          %v333 = vld [vmem:[%s251 + $0xa0] sm:$0xff]
          %v334 = vld [vmem:[%s251 + $0xa8] sm:$0xff]
          %v335 = vld [vmem:[%s251 + $0xb0] sm:$0xff]
          %v336 = vld [vmem:[%s251 + $0xb8] sm:$0xff]
          %v337 = vld [vmem:[%s251 + $0xc0] sm:$0xff]
          %v338 = vld [vmem:[%s251 + $0xc8] sm:$0xff]
          %v339 = vld [vmem:[%s251 + $0xd0] sm:$0xff]
          %v340 = vld [vmem:[%s251 + $0xd8] sm:$0xff]
          %v341 = vld [vmem:[%s251 + $0xe0] sm:$0xff]
          %v342 = vld [vmem:[%s251 + $0xe8] sm:$0xff]
          %v343 = vld [vmem:[%s251 + $0xf0] sm:$0xff]
          %v344 = vld [vmem:[%s251 + $0xf8] sm:$0xff]
          %v345 = vmul.f32 %v313, 0.12751743
          %v346 = vmul.f32 %v314, 0.12751743
          %v347 = vmul.f32 %v315, 0.12751743
          %v348 = vmul.f32 %v316, 0.12751743
          %v349 = vmul.f32 %v317, 0.12751743
          %v350 = vmul.f32 %v318, 0.12751743
          %v351 = vmul.f32 %v319, 0.12751743
          %v352 = vmul.f32 %v320, 0.12751743
          %v353 = vmul.f32 %v321, 0.12751743
          %v354 = vmul.f32 %v322, 0.12751743
          %v355 = vmul.f32 %v323, 0.12751743
          %v356 = vmul.f32 %v324, 0.12751743
          %v357 = vmul.f32 %v325, 0.12751743
          %v358 = vmul.f32 %v326, 0.12751743
          %v359 = vmul.f32 %v327, 0.12751743
          %v360 = vmul.f32 %v328, 0.12751743
          %v361 = vmul.f32 %v329, 0.12751743
          %v362 = vmul.f32 %v330, 0.12751743
          %v363 = vmul.f32 %v331, 0.12751743
          %v364 = vmul.f32 %v332, 0.12751743
          %v365 = vmul.f32 %v333, 0.12751743
          %v366 = vmul.f32 %v334, 0.12751743
          %v367 = vmul.f32 %v335, 0.12751743
          %v368 = vmul.f32 %v336, 0.12751743
          %v369 = vmul.f32 %v337, 0.12751743
          %v370 = vmul.f32 %v338, 0.12751743
          %v371 = vmul.f32 %v339, 0.12751743
          %v372 = vmul.f32 %v340, 0.12751743
          %v373 = vmul.f32 %v341, 0.12751743
          %v374 = vmul.f32 %v342, 0.12751743
          %v375 = vmul.f32 %v343, 0.12751743
          %v376 = vmul.f32 %v344, 0.12751743
          %v377 = vpack.c.bf16 %v345, %v345
          %v378 = vpack.c.bf16 %v346, %v346
          %v379 = vpack.c.bf16 %v347, %v347
          %v380 = vpack.c.bf16 %v348, %v348
          %v381 = vpack.c.bf16 %v349, %v349
          %v382 = vpack.c.bf16 %v350, %v350
          %v383 = vpack.c.bf16 %v351, %v351
          %v384 = vpack.c.bf16 %v352, %v352
          %v385 = vpack.c.bf16 %v353, %v353
          %v386 = vpack.c.bf16 %v354, %v354
          %v387 = vpack.c.bf16 %v355, %v355
          %v388 = vpack.c.bf16 %v356, %v356
          %v389 = vpack.c.bf16 %v357, %v357
          %v390 = vpack.c.bf16 %v358, %v358
          %v391 = vpack.c.bf16 %v359, %v359
          %v392 = vpack.c.bf16 %v360, %v360
          %v393 = vpack.c.bf16 %v361, %v361
          %v394 = vpack.c.bf16 %v362, %v362
          %v395 = vpack.c.bf16 %v363, %v363
          %v396 = vpack.c.bf16 %v364, %v364
          %v397 = vpack.c.bf16 %v365, %v365
          %v398 = vpack.c.bf16 %v366, %v366
          %v399 = vpack.c.bf16 %v367, %v367
          %v400 = vpack.c.bf16 %v368, %v368
          %v401 = vpack.c.bf16 %v369, %v369
          %v402 = vpack.c.bf16 %v370, %v370
          %v403 = vpack.c.bf16 %v371, %v371
          %v404 = vpack.c.bf16 %v372, %v372
          %v405 = vpack.c.bf16 %v373, %v373
          %v406 = vpack.c.bf16 %v374, %v374
          %v407 = vpack.c.bf16 %v375, %v375
          %v408 = vpack.c.bf16 %v376, %v376
          %409 = vst [vmem:[#allocation2] sm:$0xf] %v377
          %410 = vst [vmem:[#allocation2 + $0x4] sm:$0xf] %v378
          %411 = vst [vmem:[#allocation2 + $0x8] sm:$0xf] %v379
          %412 = vst [vmem:[#allocation2 + $0xc] sm:$0xf] %v380
          %413 = vst [vmem:[#allocation2 + $0x10] sm:$0xf] %v381
          %414 = vst [vmem:[#allocation2 + $0x14] sm:$0xf] %v382
          %415 = vst [vmem:[#allocation2 + $0x18] sm:$0xf] %v383
          %416 = vst [vmem:[#allocation2 + $0x1c] sm:$0xf] %v384
          %417 = vst [vmem:[#allocation2 + $0x20] sm:$0xf] %v385
          %418 = vst [vmem:[#allocation2 + $0x24] sm:$0xf] %v386
          %419 = vst [vmem:[#allocation2 + $0x28] sm:$0xf] %v387
          %420 = vst [vmem:[#allocation2 + $0x2c] sm:$0xf] %v388
          %421 = vst [vmem:[#allocation2 + $0x30] sm:$0xf] %v389
          %422 = vst [vmem:[#allocation2 + $0x34] sm:$0xf] %v390
          %423 = vst [vmem:[#allocation2 + $0x38] sm:$0xf] %v391
          %424 = vst [vmem:[#allocation2 + $0x3c] sm:$0xf] %v392
          %425 = vst [vmem:[#allocation2 + $0x40] sm:$0xf] %v393
          %426 = vst [vmem:[#allocation2 + $0x44] sm:$0xf] %v394
          %427 = vst [vmem:[#allocation2 + $0x48] sm:$0xf] %v395
          %428 = vst [vmem:[#allocation2 + $0x4c] sm:$0xf] %v396
          %429 = vst [vmem:[#allocation2 + $0x50] sm:$0xf] %v397
          %430 = vst [vmem:[#allocation2 + $0x54] sm:$0xf] %v398
          %431 = vst [vmem:[#allocation2 + $0x58] sm:$0xf] %v399
          %432 = vst [vmem:[#allocation2 + $0x5c] sm:$0xf] %v400
          %433 = vst [vmem:[#allocation2 + $0x60] sm:$0xf] %v401
          %434 = vst [vmem:[#allocation2 + $0x64] sm:$0xf] %v402
          %435 = vst [vmem:[#allocation2 + $0x68] sm:$0xf] %v403
          %436 = vst [vmem:[#allocation2 + $0x6c] sm:$0xf] %v404
          %437 = vst [vmem:[#allocation2 + $0x70] sm:$0xf] %v405
          %438 = vst [vmem:[#allocation2 + $0x74] sm:$0xf] %v406
          %439 = vst [vmem:[#allocation2 + $0x78] sm:$0xf] %v407
          %440 = vst [vmem:[#allocation2 + $0x7c] sm:$0xf] %v408
          %vm441 = vcmask 7168
          %442 = vst.msk [vmem:[#allocation3] sm:$0xff] %vm441, -inf
          %443 = vst.msk [vmem:[#allocation3 + $0x8] sm:$0xff] %vm441, -inf
          %444 = vst.msk [vmem:[#allocation3 + $0x10] sm:$0xff] %vm441, -inf
          %445 = vst.msk [vmem:[#allocation3 + $0x18] sm:$0xff] %vm441, -inf
          %446 = vst.msk [vmem:[#allocation3 + $0x20] sm:$0xff] %vm441, -inf
          %447 = vst.msk [vmem:[#allocation3 + $0x28] sm:$0xff] %vm441, -inf
          %448 = vst.msk [vmem:[#allocation3 + $0x30] sm:$0xff] %vm441, -inf
          %449 = vst.msk [vmem:[#allocation3 + $0x38] sm:$0xff] %vm441, -inf
          %450 = vst.msk [vmem:[#allocation3 + $0x40] sm:$0xff] %vm441, -inf
          %451 = vst.msk [vmem:[#allocation3 + $0x48] sm:$0xff] %vm441, -inf
          %452 = vst.msk [vmem:[#allocation3 + $0x50] sm:$0xff] %vm441, -inf
          %453 = vst.msk [vmem:[#allocation3 + $0x58] sm:$0xff] %vm441, -inf
          %454 = vst.msk [vmem:[#allocation3 + $0x60] sm:$0xff] %vm441, -inf
          %455 = vst.msk [vmem:[#allocation3 + $0x68] sm:$0xff] %vm441, -inf
          %456 = vst.msk [vmem:[#allocation3 + $0x70] sm:$0xff] %vm441, -inf
          %457 = vst.msk [vmem:[#allocation3 + $0x78] sm:$0xff] %vm441, -inf
          %458 = vst.msk [vmem:[#allocation3 + $0x80] sm:$0xff] %vm441, -inf
          %459 = vst.msk [vmem:[#allocation3 + $0x88] sm:$0xff] %vm441, -inf
          %460 = vst.msk [vmem:[#allocation3 + $0x90] sm:$0xff] %vm441, -inf
          %461 = vst.msk [vmem:[#allocation3 + $0x98] sm:$0xff] %vm441, -inf
          %462 = vst.msk [vmem:[#allocation3 + $0xa0] sm:$0xff] %vm441, -inf
          %463 = vst.msk [vmem:[#allocation3 + $0xa8] sm:$0xff] %vm441, -inf
          %464 = vst.msk [vmem:[#allocation3 + $0xb0] sm:$0xff] %vm441, -inf
          %465 = vst.msk [vmem:[#allocation3 + $0xb8] sm:$0xff] %vm441, -inf
          %466 = vst.msk [vmem:[#allocation3 + $0xc0] sm:$0xff] %vm441, -inf
          %467 = vst.msk [vmem:[#allocation3 + $0xc8] sm:$0xff] %vm441, -inf
          %468 = vst.msk [vmem:[#allocation3 + $0xd0] sm:$0xff] %vm441, -inf
          %469 = vst.msk [vmem:[#allocation3 + $0xd8] sm:$0xff] %vm441, -inf
          %470 = vst.msk [vmem:[#allocation3 + $0xe0] sm:$0xff] %vm441, -inf
          %471 = vst.msk [vmem:[#allocation3 + $0xe8] sm:$0xff] %vm441, -inf
          %472 = vst.msk [vmem:[#allocation3 + $0xf0] sm:$0xff] %vm441, -inf
          %473 = vst.msk [vmem:[#allocation3 + $0xf8] sm:$0xff] %vm441, -inf
          %474 = vst.msk [vmem:[#allocation4] sm:$0xff] %vm441, 0.0
          %475 = vst.msk [vmem:[#allocation4 + $0x8] sm:$0xff] %vm441, 0.0
          %476 = vst.msk [vmem:[#allocation4 + $0x10] sm:$0xff] %vm441, 0.0
          %477 = vst.msk [vmem:[#allocation4 + $0x18] sm:$0xff] %vm441, 0.0
          %478 = vst.msk [vmem:[#allocation4 + $0x20] sm:$0xff] %vm441, 0.0
          %479 = vst.msk [vmem:[#allocation4 + $0x28] sm:$0xff] %vm441, 0.0
          %480 = vst.msk [vmem:[#allocation4 + $0x30] sm:$0xff] %vm441, 0.0
          %481 = vst.msk [vmem:[#allocation4 + $0x38] sm:$0xff] %vm441, 0.0
          %482 = vst.msk [vmem:[#allocation4 + $0x40] sm:$0xff] %vm441, 0.0
          %483 = vst.msk [vmem:[#allocation4 + $0x48] sm:$0xff] %vm441, 0.0
          %484 = vst.msk [vmem:[#allocation4 + $0x50] sm:$0xff] %vm441, 0.0
          %485 = vst.msk [vmem:[#allocation4 + $0x58] sm:$0xff] %vm441, 0.0
          %486 = vst.msk [vmem:[#allocation4 + $0x60] sm:$0xff] %vm441, 0.0
          %487 = vst.msk [vmem:[#allocation4 + $0x68] sm:$0xff] %vm441, 0.0
          %488 = vst.msk [vmem:[#allocation4 + $0x70] sm:$0xff] %vm441, 0.0
          %489 = vst.msk [vmem:[#allocation4 + $0x78] sm:$0xff] %vm441, 0.0
          %490 = vst.msk [vmem:[#allocation4 + $0x80] sm:$0xff] %vm441, 0.0
          %491 = vst.msk [vmem:[#allocation4 + $0x88] sm:$0xff] %vm441, 0.0
          %492 = vst.msk [vmem:[#allocation4 + $0x90] sm:$0xff] %vm441, 0.0
          %493 = vst.msk [vmem:[#allocation4 + $0x98] sm:$0xff] %vm441, 0.0
          %494 = vst.msk [vmem:[#allocation4 + $0xa0] sm:$0xff] %vm441, 0.0
          %495 = vst.msk [vmem:[#allocation4 + $0xa8] sm:$0xff] %vm441, 0.0
          %496 = vst.msk [vmem:[#allocation4 + $0xb0] sm:$0xff] %vm441, 0.0
          %497 = vst.msk [vmem:[#allocation4 + $0xb8] sm:$0xff] %vm441, 0.0
          %498 = vst.msk [vmem:[#allocation4 + $0xc0] sm:$0xff] %vm441, 0.0
          %499 = vst.msk [vmem:[#allocation4 + $0xc8] sm:$0xff] %vm441, 0.0
          %500 = vst.msk [vmem:[#allocation4 + $0xd0] sm:$0xff] %vm441, 0.0
          %501 = vst.msk [vmem:[#allocation4 + $0xd8] sm:$0xff] %vm441, 0.0
          %502 = vst.msk [vmem:[#allocation4 + $0xe0] sm:$0xff] %vm441, 0.0
          %503 = vst.msk [vmem:[#allocation4 + $0xe8] sm:$0xff] %vm441, 0.0
          %504 = vst.msk [vmem:[#allocation4 + $0xf0] sm:$0xff] %vm441, 0.0
          %505 = vst.msk [vmem:[#allocation4 + $0xf8] sm:$0xff] %vm441, 0.0
          %506 = vst [vmem:[#allocation5] sm:$0xff] 0.0
          %507 = vst [vmem:[#allocation5 + $0x8] sm:$0xff] 0.0
          %508 = vst [vmem:[#allocation5 + $0x10] sm:$0xff] 0.0
          %509 = vst [vmem:[#allocation5 + $0x18] sm:$0xff] 0.0
          %510 = vst [vmem:[#allocation5 + $0x20] sm:$0xff] 0.0
          %511 = vst [vmem:[#allocation5 + $0x28] sm:$0xff] 0.0
          %512 = vst [vmem:[#allocation5 + $0x30] sm:$0xff] 0.0
          %513 = vst [vmem:[#allocation5 + $0x38] sm:$0xff] 0.0
          %514 = vst [vmem:[#allocation5 + $0x40] sm:$0xff] 0.0
          %515 = vst [vmem:[#allocation5 + $0x48] sm:$0xff] 0.0
          %516 = vst [vmem:[#allocation5 + $0x50] sm:$0xff] 0.0
          %517 = vst [vmem:[#allocation5 + $0x58] sm:$0xff] 0.0
          %518 = vst [vmem:[#allocation5 + $0x60] sm:$0xff] 0.0
          %519 = vst [vmem:[#allocation5 + $0x68] sm:$0xff] 0.0
          %520 = vst [vmem:[#allocation5 + $0x70] sm:$0xff] 0.0
          %521 = vst [vmem:[#allocation5 + $0x78] sm:$0xff] 0.0
          %522 = vst [vmem:[#allocation5 + $0x80] sm:$0xff] 0.0
          %523 = vst [vmem:[#allocation5 + $0x88] sm:$0xff] 0.0
          %524 = vst [vmem:[#allocation5 + $0x90] sm:$0xff] 0.0
          %525 = vst [vmem:[#allocation5 + $0x98] sm:$0xff] 0.0
          %526 = vst [vmem:[#allocation5 + $0xa0] sm:$0xff] 0.0
          %527 = vst [vmem:[#allocation5 + $0xa8] sm:$0xff] 0.0
          %528 = vst [vmem:[#allocation5 + $0xb0] sm:$0xff] 0.0
          %529 = vst [vmem:[#allocation5 + $0xb8] sm:$0xff] 0.0
          %530 = vst [vmem:[#allocation5 + $0xc0] sm:$0xff] 0.0
          %531 = vst [vmem:[#allocation5 + $0xc8] sm:$0xff] 0.0
          %532 = vst [vmem:[#allocation5 + $0xd0] sm:$0xff] 0.0
          %533 = vst [vmem:[#allocation5 + $0xd8] sm:$0xff] 0.0
          %534 = vst [vmem:[#allocation5 + $0xe0] sm:$0xff] 0.0
          %535 = vst [vmem:[#allocation5 + $0xe8] sm:$0xff] 0.0
          %536 = vst [vmem:[#allocation5 + $0xf0] sm:$0xff] 0.0
          %537 = vst [vmem:[#allocation5 + $0xf8] sm:$0xff] 0.0
        $region48: #{tpu_custom_call.1} parent=31 // pred_fallthru
          _
        %v538 = vld [vmem:[#allocation2] sm:$0xf]
        %v539 = vld [vmem:[#allocation2 + $0x4] sm:$0xf]
        %v540 = vld [vmem:[#allocation2 + $0x8] sm:$0xf]
        %v541 = vld [vmem:[#allocation2 + $0xc] sm:$0xf]
        %v542 = vld [vmem:[#allocation2 + $0x10] sm:$0xf]
        %v543 = vld [vmem:[#allocation2 + $0x14] sm:$0xf]
        %v544 = vld [vmem:[#allocation2 + $0x18] sm:$0xf]
        %v545 = vld [vmem:[#allocation2 + $0x1c] sm:$0xf]
        %v546 = vld [vmem:[#allocation2 + $0x20] sm:$0xf]
        %v547 = vld [vmem:[#allocation2 + $0x24] sm:$0xf]
        %v548 = vld [vmem:[#allocation2 + $0x28] sm:$0xf]
        %v549 = vld [vmem:[#allocation2 + $0x2c] sm:$0xf]
        %v550 = vld [vmem:[#allocation2 + $0x30] sm:$0xf]
        %v551 = vld [vmem:[#allocation2 + $0x34] sm:$0xf]
        %v552 = vld [vmem:[#allocation2 + $0x38] sm:$0xf]
        %v553 = vld [vmem:[#allocation2 + $0x3c] sm:$0xf]
        %v554 = vld [vmem:[#allocation2 + $0x40] sm:$0xf]
        %v555 = vld [vmem:[#allocation2 + $0x44] sm:$0xf]
        %v556 = vld [vmem:[#allocation2 + $0x48] sm:$0xf]
        %v557 = vld [vmem:[#allocation2 + $0x4c] sm:$0xf]
        %v558 = vld [vmem:[#allocation2 + $0x50] sm:$0xf]
        %v559 = vld [vmem:[#allocation2 + $0x54] sm:$0xf]
        %v560 = vld [vmem:[#allocation2 + $0x58] sm:$0xf]
        %v561 = vld [vmem:[#allocation2 + $0x5c] sm:$0xf]
        %v562 = vld [vmem:[#allocation2 + $0x60] sm:$0xf]
        %v563 = vld [vmem:[#allocation2 + $0x64] sm:$0xf]
        %v564 = vld [vmem:[#allocation2 + $0x68] sm:$0xf]
        %v565 = vld [vmem:[#allocation2 + $0x6c] sm:$0xf]
        %v566 = vld [vmem:[#allocation2 + $0x70] sm:$0xf]
        %v567 = vld [vmem:[#allocation2 + $0x74] sm:$0xf]
        %v568 = vld [vmem:[#allocation2 + $0x78] sm:$0xf]
        %v569 = vld [vmem:[#allocation2 + $0x7c] sm:$0xf]
        %v570 = vld [vmem:[%s261] sm:$0xff]
        %v571 = vld [vmem:[%s261 + $0x8] sm:$0xff]
        %v572 = vld [vmem:[%s261 + $0x10] sm:$0xff]
        %v573 = vld [vmem:[%s261 + $0x18] sm:$0xff]
        %v574 = vld [vmem:[%s261 + $0x20] sm:$0xff]
        %v575 = vld [vmem:[%s261 + $0x28] sm:$0xff]
        %v576 = vld [vmem:[%s261 + $0x30] sm:$0xff]
        %v577 = vld [vmem:[%s261 + $0x38] sm:$0xff]
        %v578 = vld [vmem:[%s261 + $0x40] sm:$0xff]
        %v579 = vld [vmem:[%s261 + $0x48] sm:$0xff]
        %v580 = vld [vmem:[%s261 + $0x50] sm:$0xff]
        %v581 = vld [vmem:[%s261 + $0x58] sm:$0xff]
        %v582 = vld [vmem:[%s261 + $0x60] sm:$0xff]
        %v583 = vld [vmem:[%s261 + $0x68] sm:$0xff]
        %v584 = vld [vmem:[%s261 + $0x70] sm:$0xff]
        %v585 = vld [vmem:[%s261 + $0x78] sm:$0xff]
        %v586 = vld [vmem:[%s261 + $0x80] sm:$0xff]
        %v587 = vld [vmem:[%s261 + $0x88] sm:$0xff]
        %v588 = vld [vmem:[%s261 + $0x90] sm:$0xff]
        %v589 = vld [vmem:[%s261 + $0x98] sm:$0xff]
        %v590 = vld [vmem:[%s261 + $0xa0] sm:$0xff]
        %v591 = vld [vmem:[%s261 + $0xa8] sm:$0xff]
        %v592 = vld [vmem:[%s261 + $0xb0] sm:$0xff]
        %v593 = vld [vmem:[%s261 + $0xb8] sm:$0xff]
        %v594 = vld [vmem:[%s261 + $0xc0] sm:$0xff]
        %v595 = vld [vmem:[%s261 + $0xc8] sm:$0xff]
        %v596 = vld [vmem:[%s261 + $0xd0] sm:$0xff]
        %v597 = vld [vmem:[%s261 + $0xd8] sm:$0xff]
        %v598 = vld [vmem:[%s261 + $0xe0] sm:$0xff]
        %v599 = vld [vmem:[%s261 + $0xe8] sm:$0xff]
        %v600 = vld [vmem:[%s261 + $0xf0] sm:$0xff]
        %v601 = vld [vmem:[%s261 + $0xf8] sm:$0xff]
        %v602 = vpack.c.bf16 %v571, %v570
        %v603 = vpack.c.bf16 %v573, %v572
        %v604 = vpack.c.bf16 %v575, %v574
        %v605 = vpack.c.bf16 %v577, %v576
        %v606 = vpack.c.bf16 %v579, %v578
        %v607 = vpack.c.bf16 %v581, %v580
        %v608 = vpack.c.bf16 %v583, %v582
        %v609 = vpack.c.bf16 %v585, %v584
        %v610 = vpack.c.bf16 %v587, %v586
        %v611 = vpack.c.bf16 %v589, %v588
        %v612 = vpack.c.bf16 %v591, %v590
        %v613 = vpack.c.bf16 %v593, %v592
        %v614 = vpack.c.bf16 %v595, %v594
        %v615 = vpack.c.bf16 %v597, %v596
        %v616 = vpack.c.bf16 %v599, %v598
        %v617 = vpack.c.bf16 %v601, %v600
        %v618 = vld [vmem:[%s271] sm:$0xff]
        %v619 = vld [vmem:[%s271 + $0x8] sm:$0xff]
        %v620 = vld [vmem:[%s271 + $0x10] sm:$0xff]
        %v621 = vld [vmem:[%s271 + $0x18] sm:$0xff]
        %v622 = vld [vmem:[%s271 + $0x20] sm:$0xff]
        %v623 = vld [vmem:[%s271 + $0x28] sm:$0xff]
        %v624 = vld [vmem:[%s271 + $0x30] sm:$0xff]
        %v625 = vld [vmem:[%s271 + $0x38] sm:$0xff]
        %v626 = vld [vmem:[%s271 + $0x40] sm:$0xff]
        %v627 = vld [vmem:[%s271 + $0x48] sm:$0xff]
        %v628 = vld [vmem:[%s271 + $0x50] sm:$0xff]
        %v629 = vld [vmem:[%s271 + $0x58] sm:$0xff]
        %v630 = vld [vmem:[%s271 + $0x60] sm:$0xff]
        %v631 = vld [vmem:[%s271 + $0x68] sm:$0xff]
        %v632 = vld [vmem:[%s271 + $0x70] sm:$0xff]
        %v633 = vld [vmem:[%s271 + $0x78] sm:$0xff]
        %v634 = vld [vmem:[%s271 + $0x80] sm:$0xff]
        %v635 = vld [vmem:[%s271 + $0x88] sm:$0xff]
        %v636 = vld [vmem:[%s271 + $0x90] sm:$0xff]
        %v637 = vld [vmem:[%s271 + $0x98] sm:$0xff]
        %v638 = vld [vmem:[%s271 + $0xa0] sm:$0xff]
        %v639 = vld [vmem:[%s271 + $0xa8] sm:$0xff]
        %v640 = vld [vmem:[%s271 + $0xb0] sm:$0xff]
        %v641 = vld [vmem:[%s271 + $0xb8] sm:$0xff]
        %v642 = vld [vmem:[%s271 + $0xc0] sm:$0xff]
        %v643 = vld [vmem:[%s271 + $0xc8] sm:$0xff]
        %v644 = vld [vmem:[%s271 + $0xd0] sm:$0xff]
        %v645 = vld [vmem:[%s271 + $0xd8] sm:$0xff]
        %v646 = vld [vmem:[%s271 + $0xe0] sm:$0xff]
        %v647 = vld [vmem:[%s271 + $0xe8] sm:$0xff]
        %v648 = vld [vmem:[%s271 + $0xf0] sm:$0xff]
        %v649 = vld [vmem:[%s271 + $0xf8] sm:$0xff]
        %v650 = vpack.c.bf16 %v619, %v618
        %v651 = vpack.c.bf16 %v621, %v620
        %v652 = vpack.c.bf16 %v623, %v622
        %v653 = vpack.c.bf16 %v625, %v624
        %v654 = vpack.c.bf16 %v627, %v626
        %v655 = vpack.c.bf16 %v629, %v628
        %v656 = vpack.c.bf16 %v631, %v630
        %v657 = vpack.c.bf16 %v633, %v632
        %v658 = vpack.c.bf16 %v635, %v634
        %v659 = vpack.c.bf16 %v637, %v636
        %v660 = vpack.c.bf16 %v639, %v638
        %v661 = vpack.c.bf16 %v641, %v640
        %v662 = vpack.c.bf16 %v643, %v642
        %v663 = vpack.c.bf16 %v645, %v644
        %v664 = vpack.c.bf16 %v647, %v646
        %v665 = vpack.c.bf16 %v649, %v648
        %v698 = vunpack.c.l.b16 %v538
        %v699 = vunpack.c.l.b16 %v539
        %v700 = vunpack.c.l.b16 %v540
        %v701 = vunpack.c.l.b16 %v541
        %v702 = vunpack.c.l.b16 %v542
        %v703 = vunpack.c.l.b16 %v543
        %v704 = vunpack.c.l.b16 %v544
        %v705 = vunpack.c.l.b16 %v545
        %v706 = vunpack.c.l.b16 %v546
        %v707 = vunpack.c.l.b16 %v547
        %v708 = vunpack.c.l.b16 %v548
        %v709 = vunpack.c.l.b16 %v549
        %v710 = vunpack.c.l.b16 %v550
        %v711 = vunpack.c.l.b16 %v551
        %v712 = vunpack.c.l.b16 %v552
        %v713 = vunpack.c.l.b16 %v553
        %v714 = vunpack.c.l.b16 %v554
        %v715 = vunpack.c.l.b16 %v555
        %v716 = vunpack.c.l.b16 %v556
        %v717 = vunpack.c.l.b16 %v557
        %v718 = vunpack.c.l.b16 %v558
        %v719 = vunpack.c.l.b16 %v559
        %v720 = vunpack.c.l.b16 %v560
        %v721 = vunpack.c.l.b16 %v561
        %v722 = vunpack.c.l.b16 %v562
        %v723 = vunpack.c.l.b16 %v563
        %v724 = vunpack.c.l.b16 %v564
        %v725 = vunpack.c.l.b16 %v565
        %v726 = vunpack.c.l.b16 %v566
        %v727 = vunpack.c.l.b16 %v567
        %v728 = vunpack.c.l.b16 %v568
        %v729 = vunpack.c.l.b16 %v569
        %v730 = vpack.c.b16 %v699, %v698
        %v731 = vpack.c.b16 %v701, %v700
        %v732 = vpack.c.b16 %v703, %v702
        %v733 = vpack.c.b16 %v705, %v704
        %v734 = vpack.c.b16 %v707, %v706
        %v735 = vpack.c.b16 %v709, %v708
        %v736 = vpack.c.b16 %v711, %v710
        %v737 = vpack.c.b16 %v713, %v712
        %v738 = vpack.c.b16 %v715, %v714
        %v739 = vpack.c.b16 %v717, %v716
        %v740 = vpack.c.b16 %v719, %v718
        %v741 = vpack.c.b16 %v721, %v720
        %v742 = vpack.c.b16 %v723, %v722
        %v743 = vpack.c.b16 %v725, %v724
        %v744 = vpack.c.b16 %v727, %v726
        %v745 = vpack.c.b16 %v729, %v728
        %762 = vmatpush.bf16.xpose.msra.mxu0 %v609
        %763 = vmatpush.bf16.xpose.msra.mxu0 %v608
        %764 = vmatpush.bf16.xpose.msra.mxu0 %v607
        %765 = vmatpush.bf16.xpose.msra.mxu0 %v606
        %766 = vmatpush.bf16.xpose.msra.mxu0 %v605
        %767 = vmatpush.bf16.xpose.msra.mxu0 %v604
        %768 = vmatpush.bf16.xpose.msra.mxu0 %v603
        %769 = vmatpush.bf16.xpose.msra.mxu0 %v602
        %770 = vmatmul.bf16.gmra.mxu0 %v730
        %v771 = vpop.f32.mrf.mxu0
        %v772 = vadd.f32 0.0, %v771
        %v773 = vpop.f32.mrf.mxu0
        %v774 = vadd.f32 0.0, %v773
        %775 = vmatmul.bf16.gmra.mxu0 %v731
        %v776 = vpop.f32.mrf.mxu0
        %v777 = vadd.f32 0.0, %v776
        %v778 = vpop.f32.mrf.mxu0
        %v779 = vadd.f32 0.0, %v778
        %780 = vmatmul.bf16.gmra.mxu0 %v732
        %v781 = vpop.f32.mrf.mxu0
        %v782 = vadd.f32 0.0, %v781
        %v783 = vpop.f32.mrf.mxu0
        %v784 = vadd.f32 0.0, %v783
        %785 = vmatmul.bf16.gmra.mxu0 %v733
        %v786 = vpop.f32.mrf.mxu0
        %v787 = vadd.f32 0.0, %v786
        %v788 = vpop.f32.mrf.mxu0
        %v789 = vadd.f32 0.0, %v788
        %790 = vmatmul.bf16.gmra.mxu0 %v734
        %v791 = vpop.f32.mrf.mxu0
        %v792 = vadd.f32 0.0, %v791
        %v793 = vpop.f32.mrf.mxu0
        %v794 = vadd.f32 0.0, %v793
        %795 = vmatmul.bf16.gmra.mxu0 %v735
        %v796 = vpop.f32.mrf.mxu0
        %v797 = vadd.f32 0.0, %v796
        %v798 = vpop.f32.mrf.mxu0
        %v799 = vadd.f32 0.0, %v798
        %800 = vmatmul.bf16.gmra.mxu0 %v736
        %v801 = vpop.f32.mrf.mxu0
        %v802 = vadd.f32 0.0, %v801
        %v803 = vpop.f32.mrf.mxu0
        %v804 = vadd.f32 0.0, %v803
        %805 = vmatmul.bf16.gmra.mxu0 %v737
        %v806 = vpop.f32.mrf.mxu0
        %v807 = vadd.f32 0.0, %v806
        %v808 = vpop.f32.mrf.mxu0
        %v809 = vadd.f32 0.0, %v808
        %810 = vmatmul.bf16.gmra.mxu0 %v738
        %v811 = vpop.f32.mrf.mxu0
        %v812 = vadd.f32 0.0, %v811
        %v813 = vpop.f32.mrf.mxu0
        %v814 = vadd.f32 0.0, %v813
        %815 = vmatmul.bf16.gmra.mxu0 %v739
        %v816 = vpop.f32.mrf.mxu0
        %v817 = vadd.f32 0.0, %v816
        %v818 = vpop.f32.mrf.mxu0
        %v819 = vadd.f32 0.0, %v818
        %820 = vmatmul.bf16.gmra.mxu0 %v740
        %v821 = vpop.f32.mrf.mxu0
        %v822 = vadd.f32 0.0, %v821
        %v823 = vpop.f32.mrf.mxu0
        %v824 = vadd.f32 0.0, %v823
        %825 = vmatmul.bf16.gmra.mxu0 %v741
        %v826 = vpop.f32.mrf.mxu0
        %v827 = vadd.f32 0.0, %v826
        %v828 = vpop.f32.mrf.mxu0
        %v829 = vadd.f32 0.0, %v828
        %830 = vmatmul.bf16.gmra.mxu0 %v742
        %v831 = vpop.f32.mrf.mxu0
        %v832 = vadd.f32 0.0, %v831
        %v833 = vpop.f32.mrf.mxu0
        %v834 = vadd.f32 0.0, %v833
        %835 = vmatmul.bf16.gmra.mxu0 %v743
        %v836 = vpop.f32.mrf.mxu0
        %v837 = vadd.f32 0.0, %v836
        %v838 = vpop.f32.mrf.mxu0
        %v839 = vadd.f32 0.0, %v838
        %840 = vmatmul.bf16.gmra.mxu0 %v744
        %v841 = vpop.f32.mrf.mxu0
        %v842 = vadd.f32 0.0, %v841
        %v843 = vpop.f32.mrf.mxu0
        %v844 = vadd.f32 0.0, %v843
        %845 = vmatmul.bf16.gmra.mxu0 %v745
        %v846 = vpop.f32.mrf.mxu0
        %v847 = vadd.f32 0.0, %v846
        %v848 = vpop.f32.mrf.mxu0
        %v849 = vadd.f32 0.0, %v848
        %850 = vdwg.mxu0
        %851 = vmatpush.bf16.xpose.msra.mxu0 %v617
        %852 = vmatpush.bf16.xpose.msra.mxu0 %v616
        %853 = vmatpush.bf16.xpose.msra.mxu0 %v615
        %854 = vmatpush.bf16.xpose.msra.mxu0 %v614
        %855 = vmatpush.bf16.xpose.msra.mxu0 %v613
        %856 = vmatpush.bf16.xpose.msra.mxu0 %v612
        %857 = vmatpush.bf16.xpose.msra.mxu0 %v611
        %858 = vmatpush.bf16.xpose.msra.mxu0 %v610
        %859 = vmatmul.bf16.gmra.mxu0 %v730
        %v860 = vpop.f32.mrf.mxu0
        %v861 = vadd.f32 0.0, %v860
        %v862 = vpop.f32.mrf.mxu0
        %v863 = vadd.f32 0.0, %v862
        %864 = vmatmul.bf16.gmra.mxu0 %v731
        %v865 = vpop.f32.mrf.mxu0
        %v866 = vadd.f32 0.0, %v865
        %v867 = vpop.f32.mrf.mxu0
        %v868 = vadd.f32 0.0, %v867
        %869 = vmatmul.bf16.gmra.mxu0 %v732
        %v870 = vpop.f32.mrf.mxu0
        %v871 = vadd.f32 0.0, %v870
        %v872 = vpop.f32.mrf.mxu0
        %v873 = vadd.f32 0.0, %v872
        %874 = vmatmul.bf16.gmra.mxu0 %v733
        %v875 = vpop.f32.mrf.mxu0
        %v876 = vadd.f32 0.0, %v875
        %v877 = vpop.f32.mrf.mxu0
        %v878 = vadd.f32 0.0, %v877
        %879 = vmatmul.bf16.gmra.mxu0 %v734
        %v880 = vpop.f32.mrf.mxu0
        %v881 = vadd.f32 0.0, %v880
        %v882 = vpop.f32.mrf.mxu0
        %v883 = vadd.f32 0.0, %v882
        %884 = vmatmul.bf16.gmra.mxu0 %v735
        %v885 = vpop.f32.mrf.mxu0
        %v886 = vadd.f32 0.0, %v885
        %v887 = vpop.f32.mrf.mxu0
        %v888 = vadd.f32 0.0, %v887
        %889 = vmatmul.bf16.gmra.mxu0 %v736
        %v890 = vpop.f32.mrf.mxu0
        %v891 = vadd.f32 0.0, %v890
        %v892 = vpop.f32.mrf.mxu0
        %v893 = vadd.f32 0.0, %v892
        %894 = vmatmul.bf16.gmra.mxu0 %v737
        %v895 = vpop.f32.mrf.mxu0
        %v896 = vadd.f32 0.0, %v895
        %v897 = vpop.f32.mrf.mxu0
        %v898 = vadd.f32 0.0, %v897
        %899 = vmatmul.bf16.gmra.mxu0 %v738
        %v900 = vpop.f32.mrf.mxu0
        %v901 = vadd.f32 0.0, %v900
        %v902 = vpop.f32.mrf.mxu0
        %v903 = vadd.f32 0.0, %v902
        %904 = vmatmul.bf16.gmra.mxu0 %v739
        %v905 = vpop.f32.mrf.mxu0
        %v906 = vadd.f32 0.0, %v905
        %v907 = vpop.f32.mrf.mxu0
        %v908 = vadd.f32 0.0, %v907
        %909 = vmatmul.bf16.gmra.mxu0 %v740
        %v910 = vpop.f32.mrf.mxu0
        %v911 = vadd.f32 0.0, %v910
        %v912 = vpop.f32.mrf.mxu0
        %v913 = vadd.f32 0.0, %v912
        %914 = vmatmul.bf16.gmra.mxu0 %v741
        %v915 = vpop.f32.mrf.mxu0
        %v916 = vadd.f32 0.0, %v915
        %v917 = vpop.f32.mrf.mxu0
        %v918 = vadd.f32 0.0, %v917
        %919 = vmatmul.bf16.gmra.mxu0 %v742
        %v920 = vpop.f32.mrf.mxu0
        %v921 = vadd.f32 0.0, %v920
        %v922 = vpop.f32.mrf.mxu0
        %v923 = vadd.f32 0.0, %v922
        %924 = vmatmul.bf16.gmra.mxu0 %v743
        %v925 = vpop.f32.mrf.mxu0
        %v926 = vadd.f32 0.0, %v925
        %v927 = vpop.f32.mrf.mxu0
        %v928 = vadd.f32 0.0, %v927
        %929 = vmatmul.bf16.gmra.mxu0 %v744
        %v930 = vpop.f32.mrf.mxu0
        %v931 = vadd.f32 0.0, %v930
        %v932 = vpop.f32.mrf.mxu0
        %v933 = vadd.f32 0.0, %v932
        %934 = vmatmul.bf16.gmra.mxu0 %v745
        %v935 = vpop.f32.mrf.mxu0
        %v936 = vadd.f32 0.0, %v935
        %v937 = vpop.f32.mrf.mxu0
        %v938 = vadd.f32 0.0, %v937
        %939 = vdwg.mxu0
        %v940 = vld [vmem:[#allocation3] sm:$0xff]
        %v941 = vld [vmem:[#allocation3 + $0x8] sm:$0xff]
        %v942 = vld [vmem:[#allocation3 + $0x10] sm:$0xff]
        %v943 = vld [vmem:[#allocation3 + $0x18] sm:$0xff]
        %v944 = vld [vmem:[#allocation3 + $0x20] sm:$0xff]
        %v945 = vld [vmem:[#allocation3 + $0x28] sm:$0xff]
        %v946 = vld [vmem:[#allocation3 + $0x30] sm:$0xff]
        %v947 = vld [vmem:[#allocation3 + $0x38] sm:$0xff]
        %v948 = vld [vmem:[#allocation3 + $0x40] sm:$0xff]
        %v949 = vld [vmem:[#allocation3 + $0x48] sm:$0xff]
        %v950 = vld [vmem:[#allocation3 + $0x50] sm:$0xff]
        %v951 = vld [vmem:[#allocation3 + $0x58] sm:$0xff]
        %v952 = vld [vmem:[#allocation3 + $0x60] sm:$0xff]
        %v953 = vld [vmem:[#allocation3 + $0x68] sm:$0xff]
        %v954 = vld [vmem:[#allocation3 + $0x70] sm:$0xff]
        %v955 = vld [vmem:[#allocation3 + $0x78] sm:$0xff]
        %v956 = vld [vmem:[#allocation3 + $0x80] sm:$0xff]
        %v957 = vld [vmem:[#allocation3 + $0x88] sm:$0xff]
        %v958 = vld [vmem:[#allocation3 + $0x90] sm:$0xff]
        %v959 = vld [vmem:[#allocation3 + $0x98] sm:$0xff]
        %v960 = vld [vmem:[#allocation3 + $0xa0] sm:$0xff]
        %v961 = vld [vmem:[#allocation3 + $0xa8] sm:$0xff]
        %v962 = vld [vmem:[#allocation3 + $0xb0] sm:$0xff]
        %v963 = vld [vmem:[#allocation3 + $0xb8] sm:$0xff]
        %v964 = vld [vmem:[#allocation3 + $0xc0] sm:$0xff]
        %v965 = vld [vmem:[#allocation3 + $0xc8] sm:$0xff]
        %v966 = vld [vmem:[#allocation3 + $0xd0] sm:$0xff]
        %v967 = vld [vmem:[#allocation3 + $0xd8] sm:$0xff]
        %v968 = vld [vmem:[#allocation3 + $0xe0] sm:$0xff]
        %v969 = vld [vmem:[#allocation3 + $0xe8] sm:$0xff]
        %v970 = vld [vmem:[#allocation3 + $0xf0] sm:$0xff]
        %v971 = vld [vmem:[#allocation3 + $0xf8] sm:$0xff]
        %v972 = vmax.f32 %v772, %v861
        %973 = vmax.xlane.f32.xlu0 %v972
        %v974 = vpop.xlane.xlu0 %973
        %v975 = vmax.f32 %v774, %v863
        %976 = vmax.xlane.f32.xlu0 %v975
        %v977 = vpop.xlane.xlu0 %976
        %v978 = vmax.f32 %v777, %v866
        %979 = vmax.xlane.f32.xlu0 %v978
        %v980 = vpop.xlane.xlu0 %979
        %v981 = vmax.f32 %v779, %v868
        %982 = vmax.xlane.f32.xlu0 %v981
        %v983 = vpop.xlane.xlu0 %982
        %v984 = vmax.f32 %v782, %v871
        %985 = vmax.xlane.f32.xlu0 %v984
        %v986 = vpop.xlane.xlu0 %985
        %v987 = vmax.f32 %v784, %v873
        %988 = vmax.xlane.f32.xlu0 %v987
        %v989 = vpop.xlane.xlu0 %988
        %v990 = vmax.f32 %v787, %v876
        %991 = vmax.xlane.f32.xlu0 %v990
        %v992 = vpop.xlane.xlu0 %991
        %v993 = vmax.f32 %v789, %v878
        %994 = vmax.xlane.f32.xlu0 %v993
        %v995 = vpop.xlane.xlu0 %994
        %v996 = vmax.f32 %v792, %v881
        %997 = vmax.xlane.f32.xlu0 %v996
        %v998 = vpop.xlane.xlu0 %997
        %v999 = vmax.f32 %v794, %v883
        %1000 = vmax.xlane.f32.xlu0 %v999
        %v1001 = vpop.xlane.xlu0 %1000
        %v1002 = vmax.f32 %v797, %v886
        %1003 = vmax.xlane.f32.xlu0 %v1002
        %v1004 = vpop.xlane.xlu0 %1003
        %v1005 = vmax.f32 %v799, %v888
        %1006 = vmax.xlane.f32.xlu0 %v1005
        %v1007 = vpop.xlane.xlu0 %1006
        %v1008 = vmax.f32 %v802, %v891
        %1009 = vmax.xlane.f32.xlu0 %v1008
        %v1010 = vpop.xlane.xlu0 %1009
        %v1011 = vmax.f32 %v804, %v893
        %1012 = vmax.xlane.f32.xlu0 %v1011
        %v1013 = vpop.xlane.xlu0 %1012
        %v1014 = vmax.f32 %v807, %v896
        %1015 = vmax.xlane.f32.xlu0 %v1014
        %v1016 = vpop.xlane.xlu0 %1015
        %v1017 = vmax.f32 %v809, %v898
        %1018 = vmax.xlane.f32.xlu0 %v1017
        %v1019 = vpop.xlane.xlu0 %1018
        %v1020 = vmax.f32 %v812, %v901
        %1021 = vmax.xlane.f32.xlu0 %v1020
        %v1022 = vpop.xlane.xlu0 %1021
        %v1023 = vmax.f32 %v814, %v903
        %1024 = vmax.xlane.f32.xlu0 %v1023
        %v1025 = vpop.xlane.xlu0 %1024
        %v1026 = vmax.f32 %v817, %v906
        %1027 = vmax.xlane.f32.xlu0 %v1026
        %v1028 = vpop.xlane.xlu0 %1027
        %v1029 = vmax.f32 %v819, %v908
        %1030 = vmax.xlane.f32.xlu0 %v1029
        %v1031 = vpop.xlane.xlu0 %1030
        %v1032 = vmax.f32 %v822, %v911
        %1033 = vmax.xlane.f32.xlu0 %v1032
        %v1034 = vpop.xlane.xlu0 %1033
        %v1035 = vmax.f32 %v824, %v913
        %1036 = vmax.xlane.f32.xlu0 %v1035
        %v1037 = vpop.xlane.xlu0 %1036
        %v1038 = vmax.f32 %v827, %v916
        %1039 = vmax.xlane.f32.xlu0 %v1038
        %v1040 = vpop.xlane.xlu0 %1039
        %v1041 = vmax.f32 %v829, %v918
        %1042 = vmax.xlane.f32.xlu0 %v1041
        %v1043 = vpop.xlane.xlu0 %1042
        %v1044 = vmax.f32 %v832, %v921
        %1045 = vmax.xlane.f32.xlu0 %v1044
        %v1046 = vpop.xlane.xlu0 %1045
        %v1047 = vmax.f32 %v834, %v923
        %1048 = vmax.xlane.f32.xlu0 %v1047
        %v1049 = vpop.xlane.xlu0 %1048
        %v1050 = vmax.f32 %v837, %v926
        %1051 = vmax.xlane.f32.xlu0 %v1050
        %v1052 = vpop.xlane.xlu0 %1051
        %v1053 = vmax.f32 %v839, %v928
        %1054 = vmax.xlane.f32.xlu0 %v1053
        %v1055 = vpop.xlane.xlu0 %1054
        %v1056 = vmax.f32 %v842, %v931
        %1057 = vmax.xlane.f32.xlu0 %v1056
        %v1058 = vpop.xlane.xlu0 %1057
        %v1059 = vmax.f32 %v844, %v933
        %1060 = vmax.xlane.f32.xlu0 %v1059
        %v1061 = vpop.xlane.xlu0 %1060
        %v1062 = vmax.f32 %v847, %v936
        %1063 = vmax.xlane.f32.xlu0 %v1062
        %v1064 = vpop.xlane.xlu0 %1063
        %v1065 = vmax.f32 %v849, %v938
        %1066 = vmax.xlane.f32.xlu0 %v1065
        %v1067 = vpop.xlane.xlu0 %1066
        %v1068 = vmax.f32 %v940, %v974
        %v1069 = vmax.f32 %v941, %v977
        %v1070 = vmax.f32 %v942, %v980
        %v1071 = vmax.f32 %v943, %v983
        %v1072 = vmax.f32 %v944, %v986
        %v1073 = vmax.f32 %v945, %v989
        %v1074 = vmax.f32 %v946, %v992
        %v1075 = vmax.f32 %v947, %v995
        %v1076 = vmax.f32 %v948, %v998
        %v1077 = vmax.f32 %v949, %v1001
        %v1078 = vmax.f32 %v950, %v1004
        %v1079 = vmax.f32 %v951, %v1007
        %v1080 = vmax.f32 %v952, %v1010
        %v1081 = vmax.f32 %v953, %v1013
        %v1082 = vmax.f32 %v954, %v1016
        %v1083 = vmax.f32 %v955, %v1019
        %v1084 = vmax.f32 %v956, %v1022
        %v1085 = vmax.f32 %v957, %v1025
        %v1086 = vmax.f32 %v958, %v1028
        %v1087 = vmax.f32 %v959, %v1031
        %v1088 = vmax.f32 %v960, %v1034
        %v1089 = vmax.f32 %v961, %v1037
        %v1090 = vmax.f32 %v962, %v1040
        %v1091 = vmax.f32 %v963, %v1043
        %v1092 = vmax.f32 %v964, %v1046
        %v1093 = vmax.f32 %v965, %v1049
        %v1094 = vmax.f32 %v966, %v1052
        %v1095 = vmax.f32 %v967, %v1055
        %v1096 = vmax.f32 %v968, %v1058
        %v1097 = vmax.f32 %v969, %v1061
        %v1098 = vmax.f32 %v970, %v1064
        %v1099 = vmax.f32 %v971, %v1067
        %v1100 = vsub.f32 %v940, %v1068
        %v1101 = vsub.f32 %v941, %v1069
        %v1102 = vsub.f32 %v942, %v1070
        %v1103 = vsub.f32 %v943, %v1071
        %v1104 = vsub.f32 %v944, %v1072
        %v1105 = vsub.f32 %v945, %v1073
        %v1106 = vsub.f32 %v946, %v1074
        %v1107 = vsub.f32 %v947, %v1075
        %v1108 = vsub.f32 %v948, %v1076
        %v1109 = vsub.f32 %v949, %v1077
        %v1110 = vsub.f32 %v950, %v1078
        %v1111 = vsub.f32 %v951, %v1079
        %v1112 = vsub.f32 %v952, %v1080
        %v1113 = vsub.f32 %v953, %v1081
        %v1114 = vsub.f32 %v954, %v1082
        %v1115 = vsub.f32 %v955, %v1083
        %v1116 = vsub.f32 %v956, %v1084
        %v1117 = vsub.f32 %v957, %v1085
        %v1118 = vsub.f32 %v958, %v1086
        %v1119 = vsub.f32 %v959, %v1087
        %v1120 = vsub.f32 %v960, %v1088
        %v1121 = vsub.f32 %v961, %v1089
        %v1122 = vsub.f32 %v962, %v1090
        %v1123 = vsub.f32 %v963, %v1091
        %v1124 = vsub.f32 %v964, %v1092
        %v1125 = vsub.f32 %v965, %v1093
        %v1126 = vsub.f32 %v966, %v1094
        %v1127 = vsub.f32 %v967, %v1095
        %v1128 = vsub.f32 %v968, %v1096
        %v1129 = vsub.f32 %v969, %v1097
        %v1130 = vsub.f32 %v970, %v1098
        %v1131 = vsub.f32 %v971, %v1099
        %v1132 = vpow.pop %v1100
        %v1133 = vpow.pop %v1101
        %v1134 = vpow.pop %v1102
        %v1135 = vpow.pop %v1103
        %v1136 = vpow.pop %v1104
        %v1137 = vpow.pop %v1105
        %v1138 = vpow.pop %v1106
        %v1139 = vpow.pop %v1107
        %v1140 = vpow.pop %v1108
        %v1141 = vpow.pop %v1109
        %v1142 = vpow.pop %v1110
        %v1143 = vpow.pop %v1111
        %v1144 = vpow.pop %v1112
        %v1145 = vpow.pop %v1113
        %v1146 = vpow.pop %v1114
        %v1147 = vpow.pop %v1115
        %v1148 = vpow.pop %v1116
        %v1149 = vpow.pop %v1117
        %v1150 = vpow.pop %v1118
        %v1151 = vpow.pop %v1119
        %v1152 = vpow.pop %v1120
        %v1153 = vpow.pop %v1121
        %v1154 = vpow.pop %v1122
        %v1155 = vpow.pop %v1123
        %v1156 = vpow.pop %v1124
        %v1157 = vpow.pop %v1125
        %v1158 = vpow.pop %v1126
        %v1159 = vpow.pop %v1127
        %v1160 = vpow.pop %v1128
        %v1161 = vpow.pop %v1129
        %v1162 = vpow.pop %v1130
        %v1163 = vpow.pop %v1131
        %1165 = vset.pattern.permute.xlu0 0
        %1166 = vperm.xlu0 %1165, %v1068
        %v1167 = vpop.permute.xlu0 %1166
        %1170 = vset.pattern.permute.xlu0 0
        %1171 = vperm.xlu0 %1170, %v1069
        %v1172 = vpop.permute.xlu0 %1171
        %1175 = vset.pattern.permute.xlu0 0
        %1176 = vperm.xlu0 %1175, %v1070
        %v1177 = vpop.permute.xlu0 %1176
        %1180 = vset.pattern.permute.xlu0 0
        %1181 = vperm.xlu0 %1180, %v1071
        %v1182 = vpop.permute.xlu0 %1181
        %1185 = vset.pattern.permute.xlu0 0
        %1186 = vperm.xlu0 %1185, %v1072
        %v1187 = vpop.permute.xlu0 %1186
        %1190 = vset.pattern.permute.xlu0 0
        %1191 = vperm.xlu0 %1190, %v1073
        %v1192 = vpop.permute.xlu0 %1191
        %1195 = vset.pattern.permute.xlu0 0
        %1196 = vperm.xlu0 %1195, %v1074
        %v1197 = vpop.permute.xlu0 %1196
        %1200 = vset.pattern.permute.xlu0 0
        %1201 = vperm.xlu0 %1200, %v1075
        %v1202 = vpop.permute.xlu0 %1201
        %1205 = vset.pattern.permute.xlu0 0
        %1206 = vperm.xlu0 %1205, %v1076
        %v1207 = vpop.permute.xlu0 %1206
        %1210 = vset.pattern.permute.xlu0 0
        %1211 = vperm.xlu0 %1210, %v1077
        %v1212 = vpop.permute.xlu0 %1211
        %1215 = vset.pattern.permute.xlu0 0
        %1216 = vperm.xlu0 %1215, %v1078
        %v1217 = vpop.permute.xlu0 %1216
        %1220 = vset.pattern.permute.xlu0 0
        %1221 = vperm.xlu0 %1220, %v1079
        %v1222 = vpop.permute.xlu0 %1221
        %1225 = vset.pattern.permute.xlu0 0
        %1226 = vperm.xlu0 %1225, %v1080
        %v1227 = vpop.permute.xlu0 %1226
        %1230 = vset.pattern.permute.xlu0 0
        %1231 = vperm.xlu0 %1230, %v1081
        %v1232 = vpop.permute.xlu0 %1231
        %1235 = vset.pattern.permute.xlu0 0
        %1236 = vperm.xlu0 %1235, %v1082
        %v1237 = vpop.permute.xlu0 %1236
        %1240 = vset.pattern.permute.xlu0 0
        %1241 = vperm.xlu0 %1240, %v1083
        %v1242 = vpop.permute.xlu0 %1241
        %1245 = vset.pattern.permute.xlu0 0
        %1246 = vperm.xlu0 %1245, %v1084
        %v1247 = vpop.permute.xlu0 %1246
        %1250 = vset.pattern.permute.xlu0 0
        %1251 = vperm.xlu0 %1250, %v1085
        %v1252 = vpop.permute.xlu0 %1251
        %1255 = vset.pattern.permute.xlu0 0
        %1256 = vperm.xlu0 %1255, %v1086
        %v1257 = vpop.permute.xlu0 %1256
        %1260 = vset.pattern.permute.xlu0 0
        %1261 = vperm.xlu0 %1260, %v1087
        %v1262 = vpop.permute.xlu0 %1261
        %1265 = vset.pattern.permute.xlu0 0
        %1266 = vperm.xlu0 %1265, %v1088
        %v1267 = vpop.permute.xlu0 %1266
        %1270 = vset.pattern.permute.xlu0 0
        %1271 = vperm.xlu0 %1270, %v1089
        %v1272 = vpop.permute.xlu0 %1271
        %1275 = vset.pattern.permute.xlu0 0
        %1276 = vperm.xlu0 %1275, %v1090
        %v1277 = vpop.permute.xlu0 %1276
        %1280 = vset.pattern.permute.xlu0 0
        %1281 = vperm.xlu0 %1280, %v1091
        %v1282 = vpop.permute.xlu0 %1281
        %1285 = vset.pattern.permute.xlu0 0
        %1286 = vperm.xlu0 %1285, %v1092
        %v1287 = vpop.permute.xlu0 %1286
        %1290 = vset.pattern.permute.xlu0 0
        %1291 = vperm.xlu0 %1290, %v1093
        %v1292 = vpop.permute.xlu0 %1291
        %1295 = vset.pattern.permute.xlu0 0
        %1296 = vperm.xlu0 %1295, %v1094
        %v1297 = vpop.permute.xlu0 %1296
        %1300 = vset.pattern.permute.xlu0 0
        %1301 = vperm.xlu0 %1300, %v1095
        %v1302 = vpop.permute.xlu0 %1301
        %1305 = vset.pattern.permute.xlu0 0
        %1306 = vperm.xlu0 %1305, %v1096
        %v1307 = vpop.permute.xlu0 %1306
        %1310 = vset.pattern.permute.xlu0 0
        %1311 = vperm.xlu0 %1310, %v1097
        %v1312 = vpop.permute.xlu0 %1311
        %1315 = vset.pattern.permute.xlu0 0
        %1316 = vperm.xlu0 %1315, %v1098
        %v1317 = vpop.permute.xlu0 %1316
        %1320 = vset.pattern.permute.xlu0 0
        %1321 = vperm.xlu0 %1320, %v1099
        %v1322 = vpop.permute.xlu0 %1321
        %v1324 = vsub.f32 %v772, %v1167
        %v1325 = vsub.f32 %v861, %v1167
        %v1326 = vsub.f32 %v774, %v1172
        %v1327 = vsub.f32 %v863, %v1172
        %v1328 = vsub.f32 %v777, %v1177
        %v1329 = vsub.f32 %v866, %v1177
        %v1330 = vsub.f32 %v779, %v1182
        %v1331 = vsub.f32 %v868, %v1182
        %v1332 = vsub.f32 %v782, %v1187
        %v1333 = vsub.f32 %v871, %v1187
        %v1334 = vsub.f32 %v784, %v1192
        %v1335 = vsub.f32 %v873, %v1192
        %v1336 = vsub.f32 %v787, %v1197
        %v1337 = vsub.f32 %v876, %v1197
        %v1338 = vsub.f32 %v789, %v1202
        %v1339 = vsub.f32 %v878, %v1202
        %v1340 = vsub.f32 %v792, %v1207
        %v1341 = vsub.f32 %v881, %v1207
        %v1342 = vsub.f32 %v794, %v1212
        %v1343 = vsub.f32 %v883, %v1212
        %v1344 = vsub.f32 %v797, %v1217
        %v1345 = vsub.f32 %v886, %v1217
        %v1346 = vsub.f32 %v799, %v1222
        %v1347 = vsub.f32 %v888, %v1222
        %v1348 = vsub.f32 %v802, %v1227
        %v1349 = vsub.f32 %v891, %v1227
        %v1350 = vsub.f32 %v804, %v1232
        %v1351 = vsub.f32 %v893, %v1232
        %v1352 = vsub.f32 %v807, %v1237
        %v1353 = vsub.f32 %v896, %v1237
        %v1354 = vsub.f32 %v809, %v1242
        %v1355 = vsub.f32 %v898, %v1242
        %v1356 = vsub.f32 %v812, %v1247
        %v1357 = vsub.f32 %v901, %v1247
        %v1358 = vsub.f32 %v814, %v1252
        %v1359 = vsub.f32 %v903, %v1252
        %v1360 = vsub.f32 %v817, %v1257
        %v1361 = vsub.f32 %v906, %v1257
        %v1362 = vsub.f32 %v819, %v1262
        %v1363 = vsub.f32 %v908, %v1262
        %v1364 = vsub.f32 %v822, %v1267
        %v1365 = vsub.f32 %v911, %v1267
        %v1366 = vsub.f32 %v824, %v1272
        %v1367 = vsub.f32 %v913, %v1272
        %v1368 = vsub.f32 %v827, %v1277
        %v1369 = vsub.f32 %v916, %v1277
        %v1370 = vsub.f32 %v829, %v1282
        %v1371 = vsub.f32 %v918, %v1282
        %v1372 = vsub.f32 %v832, %v1287
        %v1373 = vsub.f32 %v921, %v1287
        %v1374 = vsub.f32 %v834, %v1292
        %v1375 = vsub.f32 %v923, %v1292
        %v1376 = vsub.f32 %v837, %v1297
        %v1377 = vsub.f32 %v926, %v1297
        %v1378 = vsub.f32 %v839, %v1302
        %v1379 = vsub.f32 %v928, %v1302
        %v1380 = vsub.f32 %v842, %v1307
        %v1381 = vsub.f32 %v931, %v1307
        %v1382 = vsub.f32 %v844, %v1312
        %v1383 = vsub.f32 %v933, %v1312
        %v1384 = vsub.f32 %v847, %v1317
        %v1385 = vsub.f32 %v936, %v1317
        %v1386 = vsub.f32 %v849, %v1322
        %v1387 = vsub.f32 %v938, %v1322
        %v1388 = vpow.pop %v1324
        %v1389 = vpow.pop %v1325
        %v1390 = vpow.pop %v1326
        %v1391 = vpow.pop %v1327
        %v1392 = vpow.pop %v1328
        %v1393 = vpow.pop %v1329
        %v1394 = vpow.pop %v1330
        %v1395 = vpow.pop %v1331
        %v1396 = vpow.pop %v1332
        %v1397 = vpow.pop %v1333
        %v1398 = vpow.pop %v1334
        %v1399 = vpow.pop %v1335
        %v1400 = vpow.pop %v1336
        %v1401 = vpow.pop %v1337
        %v1402 = vpow.pop %v1338
        %v1403 = vpow.pop %v1339
        %v1404 = vpow.pop %v1340
        %v1405 = vpow.pop %v1341
        %v1406 = vpow.pop %v1342
        %v1407 = vpow.pop %v1343
        %v1408 = vpow.pop %v1344
        %v1409 = vpow.pop %v1345
        %v1410 = vpow.pop %v1346
        %v1411 = vpow.pop %v1347
        %v1412 = vpow.pop %v1348
        %v1413 = vpow.pop %v1349
        %v1414 = vpow.pop %v1350
        %v1415 = vpow.pop %v1351
        %v1416 = vpow.pop %v1352
        %v1417 = vpow.pop %v1353
        %v1418 = vpow.pop %v1354
        %v1419 = vpow.pop %v1355
        %v1420 = vpow.pop %v1356
        %v1421 = vpow.pop %v1357
        %v1422 = vpow.pop %v1358
        %v1423 = vpow.pop %v1359
        %v1424 = vpow.pop %v1360
        %v1425 = vpow.pop %v1361
        %v1426 = vpow.pop %v1362
        %v1427 = vpow.pop %v1363
        %v1428 = vpow.pop %v1364
        %v1429 = vpow.pop %v1365
        %v1430 = vpow.pop %v1366
        %v1431 = vpow.pop %v1367
        %v1432 = vpow.pop %v1368
        %v1433 = vpow.pop %v1369
        %v1434 = vpow.pop %v1370
        %v1435 = vpow.pop %v1371
        %v1436 = vpow.pop %v1372
        %v1437 = vpow.pop %v1373
        %v1438 = vpow.pop %v1374
        %v1439 = vpow.pop %v1375
        %v1440 = vpow.pop %v1376
        %v1441 = vpow.pop %v1377
        %v1442 = vpow.pop %v1378
        %v1443 = vpow.pop %v1379
        %v1444 = vpow.pop %v1380
        %v1445 = vpow.pop %v1381
        %v1446 = vpow.pop %v1382
        %v1447 = vpow.pop %v1383
        %v1448 = vpow.pop %v1384
        %v1449 = vpow.pop %v1385
        %v1450 = vpow.pop %v1386
        %v1451 = vpow.pop %v1387
        %v1452 = vld [vmem:[#allocation4] sm:$0xff]
        %v1453 = vld [vmem:[#allocation4 + $0x8] sm:$0xff]
        %v1454 = vld [vmem:[#allocation4 + $0x10] sm:$0xff]
        %v1455 = vld [vmem:[#allocation4 + $0x18] sm:$0xff]
        %v1456 = vld [vmem:[#allocation4 + $0x20] sm:$0xff]
        %v1457 = vld [vmem:[#allocation4 + $0x28] sm:$0xff]
        %v1458 = vld [vmem:[#allocation4 + $0x30] sm:$0xff]
        %v1459 = vld [vmem:[#allocation4 + $0x38] sm:$0xff]
        %v1460 = vld [vmem:[#allocation4 + $0x40] sm:$0xff]
        %v1461 = vld [vmem:[#allocation4 + $0x48] sm:$0xff]
        %v1462 = vld [vmem:[#allocation4 + $0x50] sm:$0xff]
        %v1463 = vld [vmem:[#allocation4 + $0x58] sm:$0xff]
        %v1464 = vld [vmem:[#allocation4 + $0x60] sm:$0xff]
        %v1465 = vld [vmem:[#allocation4 + $0x68] sm:$0xff]
        %v1466 = vld [vmem:[#allocation4 + $0x70] sm:$0xff]
        %v1467 = vld [vmem:[#allocation4 + $0x78] sm:$0xff]
        %v1468 = vld [vmem:[#allocation4 + $0x80] sm:$0xff]
        %v1469 = vld [vmem:[#allocation4 + $0x88] sm:$0xff]
        %v1470 = vld [vmem:[#allocation4 + $0x90] sm:$0xff]
        %v1471 = vld [vmem:[#allocation4 + $0x98] sm:$0xff]
        %v1472 = vld [vmem:[#allocation4 + $0xa0] sm:$0xff]
        %v1473 = vld [vmem:[#allocation4 + $0xa8] sm:$0xff]
        %v1474 = vld [vmem:[#allocation4 + $0xb0] sm:$0xff]
        %v1475 = vld [vmem:[#allocation4 + $0xb8] sm:$0xff]
        %v1476 = vld [vmem:[#allocation4 + $0xc0] sm:$0xff]
        %v1477 = vld [vmem:[#allocation4 + $0xc8] sm:$0xff]
        %v1478 = vld [vmem:[#allocation4 + $0xd0] sm:$0xff]
        %v1479 = vld [vmem:[#allocation4 + $0xd8] sm:$0xff]
        %v1480 = vld [vmem:[#allocation4 + $0xe0] sm:$0xff]
        %v1481 = vld [vmem:[#allocation4 + $0xe8] sm:$0xff]
        %v1482 = vld [vmem:[#allocation4 + $0xf0] sm:$0xff]
        %v1483 = vld [vmem:[#allocation4 + $0xf8] sm:$0xff]
        %v1484 = vmul.f32 %v1132, %v1452
        %v1485 = vmul.f32 %v1133, %v1453
        %v1486 = vmul.f32 %v1134, %v1454
        %v1487 = vmul.f32 %v1135, %v1455
        %v1488 = vmul.f32 %v1136, %v1456
        %v1489 = vmul.f32 %v1137, %v1457
        %v1490 = vmul.f32 %v1138, %v1458
        %v1491 = vmul.f32 %v1139, %v1459
        %v1492 = vmul.f32 %v1140, %v1460
        %v1493 = vmul.f32 %v1141, %v1461
        %v1494 = vmul.f32 %v1142, %v1462
        %v1495 = vmul.f32 %v1143, %v1463
        %v1496 = vmul.f32 %v1144, %v1464
        %v1497 = vmul.f32 %v1145, %v1465
        %v1498 = vmul.f32 %v1146, %v1466
        %v1499 = vmul.f32 %v1147, %v1467
        %v1500 = vmul.f32 %v1148, %v1468
        %v1501 = vmul.f32 %v1149, %v1469
        %v1502 = vmul.f32 %v1150, %v1470
        %v1503 = vmul.f32 %v1151, %v1471
        %v1504 = vmul.f32 %v1152, %v1472
        %v1505 = vmul.f32 %v1153, %v1473
        %v1506 = vmul.f32 %v1154, %v1474
        %v1507 = vmul.f32 %v1155, %v1475
        %v1508 = vmul.f32 %v1156, %v1476
        %v1509 = vmul.f32 %v1157, %v1477
        %v1510 = vmul.f32 %v1158, %v1478
        %v1511 = vmul.f32 %v1159, %v1479
        %v1512 = vmul.f32 %v1160, %v1480
        %v1513 = vmul.f32 %v1161, %v1481
        %v1514 = vmul.f32 %v1162, %v1482
        %v1515 = vmul.f32 %v1163, %v1483
        %v1516 = vadd.f32 %v1388, %v1389
        %1517 = vadd.xlane.f32.xlu0 %v1516
        %v1518 = vpop.xlane.xlu0 %1517
        %v1519 = vadd.f32 %v1390, %v1391
        %1520 = vadd.xlane.f32.xlu0 %v1519
        %v1521 = vpop.xlane.xlu0 %1520
        %v1522 = vadd.f32 %v1392, %v1393
        %1523 = vadd.xlane.f32.xlu0 %v1522
        %v1524 = vpop.xlane.xlu0 %1523
        %v1525 = vadd.f32 %v1394, %v1395
        %1526 = vadd.xlane.f32.xlu0 %v1525
        %v1527 = vpop.xlane.xlu0 %1526
        %v1528 = vadd.f32 %v1396, %v1397
        %1529 = vadd.xlane.f32.xlu0 %v1528
        %v1530 = vpop.xlane.xlu0 %1529
        %v1531 = vadd.f32 %v1398, %v1399
        %1532 = vadd.xlane.f32.xlu0 %v1531
        %v1533 = vpop.xlane.xlu0 %1532
        %v1534 = vadd.f32 %v1400, %v1401
        %1535 = vadd.xlane.f32.xlu0 %v1534
        %v1536 = vpop.xlane.xlu0 %1535
        %v1537 = vadd.f32 %v1402, %v1403
        %1538 = vadd.xlane.f32.xlu0 %v1537
        %v1539 = vpop.xlane.xlu0 %1538
        %v1540 = vadd.f32 %v1404, %v1405
        %1541 = vadd.xlane.f32.xlu0 %v1540
        %v1542 = vpop.xlane.xlu0 %1541
        %v1543 = vadd.f32 %v1406, %v1407
        %1544 = vadd.xlane.f32.xlu0 %v1543
        %v1545 = vpop.xlane.xlu0 %1544
        %v1546 = vadd.f32 %v1408, %v1409
        %1547 = vadd.xlane.f32.xlu0 %v1546
        %v1548 = vpop.xlane.xlu0 %1547
        %v1549 = vadd.f32 %v1410, %v1411
        %1550 = vadd.xlane.f32.xlu0 %v1549
        %v1551 = vpop.xlane.xlu0 %1550
        %v1552 = vadd.f32 %v1412, %v1413
        %1553 = vadd.xlane.f32.xlu0 %v1552
        %v1554 = vpop.xlane.xlu0 %1553
        %v1555 = vadd.f32 %v1414, %v1415
        %1556 = vadd.xlane.f32.xlu0 %v1555
        %v1557 = vpop.xlane.xlu0 %1556
        %v1558 = vadd.f32 %v1416, %v1417
        %1559 = vadd.xlane.f32.xlu0 %v1558
        %v1560 = vpop.xlane.xlu0 %1559
        %v1561 = vadd.f32 %v1418, %v1419
        %1562 = vadd.xlane.f32.xlu0 %v1561
        %v1563 = vpop.xlane.xlu0 %1562
        %v1564 = vadd.f32 %v1420, %v1421
        %1565 = vadd.xlane.f32.xlu0 %v1564
        %v1566 = vpop.xlane.xlu0 %1565
        %v1567 = vadd.f32 %v1422, %v1423
        %1568 = vadd.xlane.f32.xlu0 %v1567
        %v1569 = vpop.xlane.xlu0 %1568
        %v1570 = vadd.f32 %v1424, %v1425
        %1571 = vadd.xlane.f32.xlu0 %v1570
        %v1572 = vpop.xlane.xlu0 %1571
        %v1573 = vadd.f32 %v1426, %v1427
        %1574 = vadd.xlane.f32.xlu0 %v1573
        %v1575 = vpop.xlane.xlu0 %1574
        %v1576 = vadd.f32 %v1428, %v1429
        %1577 = vadd.xlane.f32.xlu0 %v1576
        %v1578 = vpop.xlane.xlu0 %1577
        %v1579 = vadd.f32 %v1430, %v1431
        %1580 = vadd.xlane.f32.xlu0 %v1579
        %v1581 = vpop.xlane.xlu0 %1580
        %v1582 = vadd.f32 %v1432, %v1433
        %1583 = vadd.xlane.f32.xlu0 %v1582
        %v1584 = vpop.xlane.xlu0 %1583
        %v1585 = vadd.f32 %v1434, %v1435
        %1586 = vadd.xlane.f32.xlu0 %v1585
        %v1587 = vpop.xlane.xlu0 %1586
        %v1588 = vadd.f32 %v1436, %v1437
        %1589 = vadd.xlane.f32.xlu0 %v1588
        %v1590 = vpop.xlane.xlu0 %1589
        %v1591 = vadd.f32 %v1438, %v1439
        %1592 = vadd.xlane.f32.xlu0 %v1591
        %v1593 = vpop.xlane.xlu0 %1592
        %v1594 = vadd.f32 %v1440, %v1441
        %1595 = vadd.xlane.f32.xlu0 %v1594
        %v1596 = vpop.xlane.xlu0 %1595
        %v1597 = vadd.f32 %v1442, %v1443
        %1598 = vadd.xlane.f32.xlu0 %v1597
        %v1599 = vpop.xlane.xlu0 %1598
        %v1600 = vadd.f32 %v1444, %v1445
        %1601 = vadd.xlane.f32.xlu0 %v1600
        %v1602 = vpop.xlane.xlu0 %1601
        %v1603 = vadd.f32 %v1446, %v1447
        %1604 = vadd.xlane.f32.xlu0 %v1603
        %v1605 = vpop.xlane.xlu0 %1604
        %v1606 = vadd.f32 %v1448, %v1449
        %1607 = vadd.xlane.f32.xlu0 %v1606
        %v1608 = vpop.xlane.xlu0 %1607
        %v1609 = vadd.f32 %v1450, %v1451
        %1610 = vadd.xlane.f32.xlu0 %v1609
        %v1611 = vpop.xlane.xlu0 %1610
        %v1612 = vadd.f32 %v1484, %v1518
        %v1613 = vadd.f32 %v1485, %v1521
        %v1614 = vadd.f32 %v1486, %v1524
        %v1615 = vadd.f32 %v1487, %v1527
        %v1616 = vadd.f32 %v1488, %v1530
        %v1617 = vadd.f32 %v1489, %v1533
        %v1618 = vadd.f32 %v1490, %v1536
        %v1619 = vadd.f32 %v1491, %v1539
        %v1620 = vadd.f32 %v1492, %v1542
        %v1621 = vadd.f32 %v1493, %v1545
        %v1622 = vadd.f32 %v1494, %v1548
        %v1623 = vadd.f32 %v1495, %v1551
        %v1624 = vadd.f32 %v1496, %v1554
        %v1625 = vadd.f32 %v1497, %v1557
        %v1626 = vadd.f32 %v1498, %v1560
        %v1627 = vadd.f32 %v1499, %v1563
        %v1628 = vadd.f32 %v1500, %v1566
        %v1629 = vadd.f32 %v1501, %v1569
        %v1630 = vadd.f32 %v1502, %v1572
        %v1631 = vadd.f32 %v1503, %v1575
        %v1632 = vadd.f32 %v1504, %v1578
        %v1633 = vadd.f32 %v1505, %v1581
        %v1634 = vadd.f32 %v1506, %v1584
        %v1635 = vadd.f32 %v1507, %v1587
        %v1636 = vadd.f32 %v1508, %v1590
        %v1637 = vadd.f32 %v1509, %v1593
        %v1638 = vadd.f32 %v1510, %v1596
        %v1639 = vadd.f32 %v1511, %v1599
        %v1640 = vadd.f32 %v1512, %v1602
        %v1641 = vadd.f32 %v1513, %v1605
        %v1642 = vadd.f32 %v1514, %v1608
        %v1643 = vadd.f32 %v1515, %v1611
        %vm1644 = vcmask 7168
        %1645 = vst.msk [vmem:[#allocation4] sm:$0xff] %vm1644, %v1612
        %1646 = vst.msk [vmem:[#allocation4 + $0x8] sm:$0xff] %vm1644, %v1613
        %1647 = vst.msk [vmem:[#allocation4 + $0x10] sm:$0xff] %vm1644, %v1614
        %1648 = vst.msk [vmem:[#allocation4 + $0x18] sm:$0xff] %vm1644, %v1615
        %1649 = vst.msk [vmem:[#allocation4 + $0x20] sm:$0xff] %vm1644, %v1616
        %1650 = vst.msk [vmem:[#allocation4 + $0x28] sm:$0xff] %vm1644, %v1617
        %1651 = vst.msk [vmem:[#allocation4 + $0x30] sm:$0xff] %vm1644, %v1618
        %1652 = vst.msk [vmem:[#allocation4 + $0x38] sm:$0xff] %vm1644, %v1619
        %1653 = vst.msk [vmem:[#allocation4 + $0x40] sm:$0xff] %vm1644, %v1620
        %1654 = vst.msk [vmem:[#allocation4 + $0x48] sm:$0xff] %vm1644, %v1621
        %1655 = vst.msk [vmem:[#allocation4 + $0x50] sm:$0xff] %vm1644, %v1622
        %1656 = vst.msk [vmem:[#allocation4 + $0x58] sm:$0xff] %vm1644, %v1623
        %1657 = vst.msk [vmem:[#allocation4 + $0x60] sm:$0xff] %vm1644, %v1624
        %1658 = vst.msk [vmem:[#allocation4 + $0x68] sm:$0xff] %vm1644, %v1625
        %1659 = vst.msk [vmem:[#allocation4 + $0x70] sm:$0xff] %vm1644, %v1626
        %1660 = vst.msk [vmem:[#allocation4 + $0x78] sm:$0xff] %vm1644, %v1627
        %1661 = vst.msk [vmem:[#allocation4 + $0x80] sm:$0xff] %vm1644, %v1628
        %1662 = vst.msk [vmem:[#allocation4 + $0x88] sm:$0xff] %vm1644, %v1629
        %1663 = vst.msk [vmem:[#allocation4 + $0x90] sm:$0xff] %vm1644, %v1630
        %1664 = vst.msk [vmem:[#allocation4 + $0x98] sm:$0xff] %vm1644, %v1631
        %1665 = vst.msk [vmem:[#allocation4 + $0xa0] sm:$0xff] %vm1644, %v1632
        %1666 = vst.msk [vmem:[#allocation4 + $0xa8] sm:$0xff] %vm1644, %v1633
        %1667 = vst.msk [vmem:[#allocation4 + $0xb0] sm:$0xff] %vm1644, %v1634
        %1668 = vst.msk [vmem:[#allocation4 + $0xb8] sm:$0xff] %vm1644, %v1635
        %1669 = vst.msk [vmem:[#allocation4 + $0xc0] sm:$0xff] %vm1644, %v1636
        %1670 = vst.msk [vmem:[#allocation4 + $0xc8] sm:$0xff] %vm1644, %v1637
        %1671 = vst.msk [vmem:[#allocation4 + $0xd0] sm:$0xff] %vm1644, %v1638
        %1672 = vst.msk [vmem:[#allocation4 + $0xd8] sm:$0xff] %vm1644, %v1639
        %1673 = vst.msk [vmem:[#allocation4 + $0xe0] sm:$0xff] %vm1644, %v1640
        %1674 = vst.msk [vmem:[#allocation4 + $0xe8] sm:$0xff] %vm1644, %v1641
        %1675 = vst.msk [vmem:[#allocation4 + $0xf0] sm:$0xff] %vm1644, %v1642
        %1676 = vst.msk [vmem:[#allocation4 + $0xf8] sm:$0xff] %vm1644, %v1643
        %v1677 = vld [vmem:[#allocation5] sm:$0xff]
        %v1678 = vld [vmem:[#allocation5 + $0x8] sm:$0xff]
        %v1679 = vld [vmem:[#allocation5 + $0x10] sm:$0xff]
        %v1680 = vld [vmem:[#allocation5 + $0x18] sm:$0xff]
        %v1681 = vld [vmem:[#allocation5 + $0x20] sm:$0xff]
        %v1682 = vld [vmem:[#allocation5 + $0x28] sm:$0xff]
        %v1683 = vld [vmem:[#allocation5 + $0x30] sm:$0xff]
        %v1684 = vld [vmem:[#allocation5 + $0x38] sm:$0xff]
        %v1685 = vld [vmem:[#allocation5 + $0x40] sm:$0xff]
        %v1686 = vld [vmem:[#allocation5 + $0x48] sm:$0xff]
        %v1687 = vld [vmem:[#allocation5 + $0x50] sm:$0xff]
        %v1688 = vld [vmem:[#allocation5 + $0x58] sm:$0xff]
        %v1689 = vld [vmem:[#allocation5 + $0x60] sm:$0xff]
        %v1690 = vld [vmem:[#allocation5 + $0x68] sm:$0xff]
        %v1691 = vld [vmem:[#allocation5 + $0x70] sm:$0xff]
        %v1692 = vld [vmem:[#allocation5 + $0x78] sm:$0xff]
        %v1693 = vld [vmem:[#allocation5 + $0x80] sm:$0xff]
        %v1694 = vld [vmem:[#allocation5 + $0x88] sm:$0xff]
        %v1695 = vld [vmem:[#allocation5 + $0x90] sm:$0xff]
        %v1696 = vld [vmem:[#allocation5 + $0x98] sm:$0xff]
        %v1697 = vld [vmem:[#allocation5 + $0xa0] sm:$0xff]
        %v1698 = vld [vmem:[#allocation5 + $0xa8] sm:$0xff]
        %v1699 = vld [vmem:[#allocation5 + $0xb0] sm:$0xff]
        %v1700 = vld [vmem:[#allocation5 + $0xb8] sm:$0xff]
        %v1701 = vld [vmem:[#allocation5 + $0xc0] sm:$0xff]
        %v1702 = vld [vmem:[#allocation5 + $0xc8] sm:$0xff]
        %v1703 = vld [vmem:[#allocation5 + $0xd0] sm:$0xff]
        %v1704 = vld [vmem:[#allocation5 + $0xd8] sm:$0xff]
        %v1705 = vld [vmem:[#allocation5 + $0xe0] sm:$0xff]
        %v1706 = vld [vmem:[#allocation5 + $0xe8] sm:$0xff]
        %v1707 = vld [vmem:[#allocation5 + $0xf0] sm:$0xff]
        %v1708 = vld [vmem:[#allocation5 + $0xf8] sm:$0xff]
        %1710 = vset.pattern.permute.xlu0 0
        %1711 = vperm.xlu0 %1710, %v1132
        %v1712 = vpop.permute.xlu0 %1711
        %1715 = vset.pattern.permute.xlu0 0
        %1716 = vperm.xlu0 %1715, %v1133
        %v1717 = vpop.permute.xlu0 %1716
        %1720 = vset.pattern.permute.xlu0 0
        %1721 = vperm.xlu0 %1720, %v1134
        %v1722 = vpop.permute.xlu0 %1721
        %1725 = vset.pattern.permute.xlu0 0
        %1726 = vperm.xlu0 %1725, %v1135
        %v1727 = vpop.permute.xlu0 %1726
        %1730 = vset.pattern.permute.xlu0 0
        %1731 = vperm.xlu0 %1730, %v1136
        %v1732 = vpop.permute.xlu0 %1731
        %1735 = vset.pattern.permute.xlu0 0
        %1736 = vperm.xlu0 %1735, %v1137
        %v1737 = vpop.permute.xlu0 %1736
        %1740 = vset.pattern.permute.xlu0 0
        %1741 = vperm.xlu0 %1740, %v1138
        %v1742 = vpop.permute.xlu0 %1741
        %1745 = vset.pattern.permute.xlu0 0
        %1746 = vperm.xlu0 %1745, %v1139
        %v1747 = vpop.permute.xlu0 %1746
        %1750 = vset.pattern.permute.xlu0 0
        %1751 = vperm.xlu0 %1750, %v1140
        %v1752 = vpop.permute.xlu0 %1751
        %1755 = vset.pattern.permute.xlu0 0
        %1756 = vperm.xlu0 %1755, %v1141
        %v1757 = vpop.permute.xlu0 %1756
        %1760 = vset.pattern.permute.xlu0 0
        %1761 = vperm.xlu0 %1760, %v1142
        %v1762 = vpop.permute.xlu0 %1761
        %1765 = vset.pattern.permute.xlu0 0
        %1766 = vperm.xlu0 %1765, %v1143
        %v1767 = vpop.permute.xlu0 %1766
        %1770 = vset.pattern.permute.xlu0 0
        %1771 = vperm.xlu0 %1770, %v1144
        %v1772 = vpop.permute.xlu0 %1771
        %1775 = vset.pattern.permute.xlu0 0
        %1776 = vperm.xlu0 %1775, %v1145
        %v1777 = vpop.permute.xlu0 %1776
        %1780 = vset.pattern.permute.xlu0 0
        %1781 = vperm.xlu0 %1780, %v1146
        %v1782 = vpop.permute.xlu0 %1781
        %1785 = vset.pattern.permute.xlu0 0
        %1786 = vperm.xlu0 %1785, %v1147
        %v1787 = vpop.permute.xlu0 %1786
        %1790 = vset.pattern.permute.xlu0 0
        %1791 = vperm.xlu0 %1790, %v1148
        %v1792 = vpop.permute.xlu0 %1791
        %1795 = vset.pattern.permute.xlu0 0
        %1796 = vperm.xlu0 %1795, %v1149
        %v1797 = vpop.permute.xlu0 %1796
        %1800 = vset.pattern.permute.xlu0 0
        %1801 = vperm.xlu0 %1800, %v1150
        %v1802 = vpop.permute.xlu0 %1801
        %1805 = vset.pattern.permute.xlu0 0
        %1806 = vperm.xlu0 %1805, %v1151
        %v1807 = vpop.permute.xlu0 %1806
        %1810 = vset.pattern.permute.xlu0 0
        %1811 = vperm.xlu0 %1810, %v1152
        %v1812 = vpop.permute.xlu0 %1811
        %1815 = vset.pattern.permute.xlu0 0
        %1816 = vperm.xlu0 %1815, %v1153
        %v1817 = vpop.permute.xlu0 %1816
        %1820 = vset.pattern.permute.xlu0 0
        %1821 = vperm.xlu0 %1820, %v1154
        %v1822 = vpop.permute.xlu0 %1821
        %1825 = vset.pattern.permute.xlu0 0
        %1826 = vperm.xlu0 %1825, %v1155
        %v1827 = vpop.permute.xlu0 %1826
        %1830 = vset.pattern.permute.xlu0 0
        %1831 = vperm.xlu0 %1830, %v1156
        %v1832 = vpop.permute.xlu0 %1831
        %1835 = vset.pattern.permute.xlu0 0
        %1836 = vperm.xlu0 %1835, %v1157
        %v1837 = vpop.permute.xlu0 %1836
        %1840 = vset.pattern.permute.xlu0 0
        %1841 = vperm.xlu0 %1840, %v1158
        %v1842 = vpop.permute.xlu0 %1841
        %1845 = vset.pattern.permute.xlu0 0
        %1846 = vperm.xlu0 %1845, %v1159
        %v1847 = vpop.permute.xlu0 %1846
        %1850 = vset.pattern.permute.xlu0 0
        %1851 = vperm.xlu0 %1850, %v1160
        %v1852 = vpop.permute.xlu0 %1851
        %1855 = vset.pattern.permute.xlu0 0
        %1856 = vperm.xlu0 %1855, %v1161
        %v1857 = vpop.permute.xlu0 %1856
        %1860 = vset.pattern.permute.xlu0 0
        %1861 = vperm.xlu0 %1860, %v1162
        %v1862 = vpop.permute.xlu0 %1861
        %1865 = vset.pattern.permute.xlu0 0
        %1866 = vperm.xlu0 %1865, %v1163
        %v1867 = vpop.permute.xlu0 %1866
        %v1869 = vmul.f32 %v1712, %v1677
        %v1870 = vmul.f32 %v1717, %v1678
        %v1871 = vmul.f32 %v1722, %v1679
        %v1872 = vmul.f32 %v1727, %v1680
        %v1873 = vmul.f32 %v1732, %v1681
        %v1874 = vmul.f32 %v1737, %v1682
        %v1875 = vmul.f32 %v1742, %v1683
        %v1876 = vmul.f32 %v1747, %v1684
        %v1877 = vmul.f32 %v1752, %v1685
        %v1878 = vmul.f32 %v1757, %v1686
        %v1879 = vmul.f32 %v1762, %v1687
        %v1880 = vmul.f32 %v1767, %v1688
        %v1881 = vmul.f32 %v1772, %v1689
        %v1882 = vmul.f32 %v1777, %v1690
        %v1883 = vmul.f32 %v1782, %v1691
        %v1884 = vmul.f32 %v1787, %v1692
        %v1885 = vmul.f32 %v1792, %v1693
        %v1886 = vmul.f32 %v1797, %v1694
        %v1887 = vmul.f32 %v1802, %v1695
        %v1888 = vmul.f32 %v1807, %v1696
        %v1889 = vmul.f32 %v1812, %v1697
        %v1890 = vmul.f32 %v1817, %v1698
        %v1891 = vmul.f32 %v1822, %v1699
        %v1892 = vmul.f32 %v1827, %v1700
        %v1893 = vmul.f32 %v1832, %v1701
        %v1894 = vmul.f32 %v1837, %v1702
        %v1895 = vmul.f32 %v1842, %v1703
        %v1896 = vmul.f32 %v1847, %v1704
        %v1897 = vmul.f32 %v1852, %v1705
        %v1898 = vmul.f32 %v1857, %v1706
        %v1899 = vmul.f32 %v1862, %v1707
        %v1900 = vmul.f32 %v1867, %v1708
        %v1901 = vpack.c.bf16 %v1390, %v1388
        %v1902 = vpack.c.bf16 %v1391, %v1389
        %v1903 = vpack.c.bf16 %v1394, %v1392
        %v1904 = vpack.c.bf16 %v1395, %v1393
        %v1905 = vpack.c.bf16 %v1398, %v1396
        %v1906 = vpack.c.bf16 %v1399, %v1397
        %v1907 = vpack.c.bf16 %v1402, %v1400
        %v1908 = vpack.c.bf16 %v1403, %v1401
        %v1909 = vpack.c.bf16 %v1406, %v1404
        %v1910 = vpack.c.bf16 %v1407, %v1405
        %v1911 = vpack.c.bf16 %v1410, %v1408
        %v1912 = vpack.c.bf16 %v1411, %v1409
        %v1913 = vpack.c.bf16 %v1414, %v1412
        %v1914 = vpack.c.bf16 %v1415, %v1413
        %v1915 = vpack.c.bf16 %v1418, %v1416
        %v1916 = vpack.c.bf16 %v1419, %v1417
        %v1917 = vpack.c.bf16 %v1422, %v1420
        %v1918 = vpack.c.bf16 %v1423, %v1421
        %v1919 = vpack.c.bf16 %v1426, %v1424
        %v1920 = vpack.c.bf16 %v1427, %v1425
        %v1921 = vpack.c.bf16 %v1430, %v1428
        %v1922 = vpack.c.bf16 %v1431, %v1429
        %v1923 = vpack.c.bf16 %v1434, %v1432
        %v1924 = vpack.c.bf16 %v1435, %v1433
        %v1925 = vpack.c.bf16 %v1438, %v1436
        %v1926 = vpack.c.bf16 %v1439, %v1437
        %v1927 = vpack.c.bf16 %v1442, %v1440
        %v1928 = vpack.c.bf16 %v1443, %v1441
        %v1929 = vpack.c.bf16 %v1446, %v1444
        %v1930 = vpack.c.bf16 %v1447, %v1445
        %v1931 = vpack.c.bf16 %v1450, %v1448
        %v1932 = vpack.c.bf16 %v1451, %v1449
        %1933 = vmatpush.bf16.msra.mxu0 %v657
        %1934 = vmatpush.bf16.msra.mxu0 %v656
        %1935 = vmatpush.bf16.msra.mxu0 %v655
        %1936 = vmatpush.bf16.msra.mxu0 %v654
        %1937 = vmatpush.bf16.msra.mxu0 %v653
        %1938 = vmatpush.bf16.msra.mxu0 %v652
        %1939 = vmatpush.bf16.msra.mxu0 %v651
        %1940 = vmatpush.bf16.msra.mxu0 %v650
        %1941 = vmatmul.bf16.gmra.mxu0 %v1901
        %v1942 = vpop.f32.mrf.mxu0
        %v1943 = vadd.f32 0.0, %v1942
        %v1944 = vpop.f32.mrf.mxu0
        %v1945 = vadd.f32 0.0, %v1944
        %1946 = vmatmul.bf16.gmra.mxu0 %v1903
        %v1947 = vpop.f32.mrf.mxu0
        %v1948 = vadd.f32 0.0, %v1947
        %v1949 = vpop.f32.mrf.mxu0
        %v1950 = vadd.f32 0.0, %v1949
        %1951 = vmatmul.bf16.gmra.mxu0 %v1905
        %v1952 = vpop.f32.mrf.mxu0
        %v1953 = vadd.f32 0.0, %v1952
        %v1954 = vpop.f32.mrf.mxu0
        %v1955 = vadd.f32 0.0, %v1954
        %1956 = vmatmul.bf16.gmra.mxu0 %v1907
        %v1957 = vpop.f32.mrf.mxu0
        %v1958 = vadd.f32 0.0, %v1957
        %v1959 = vpop.f32.mrf.mxu0
        %v1960 = vadd.f32 0.0, %v1959
        %1961 = vmatmul.bf16.gmra.mxu0 %v1909
        %v1962 = vpop.f32.mrf.mxu0
        %v1963 = vadd.f32 0.0, %v1962
        %v1964 = vpop.f32.mrf.mxu0
        %v1965 = vadd.f32 0.0, %v1964
        %1966 = vmatmul.bf16.gmra.mxu0 %v1911
        %v1967 = vpop.f32.mrf.mxu0
        %v1968 = vadd.f32 0.0, %v1967
        %v1969 = vpop.f32.mrf.mxu0
        %v1970 = vadd.f32 0.0, %v1969
        %1971 = vmatmul.bf16.gmra.mxu0 %v1913
        %v1972 = vpop.f32.mrf.mxu0
        %v1973 = vadd.f32 0.0, %v1972
        %v1974 = vpop.f32.mrf.mxu0
        %v1975 = vadd.f32 0.0, %v1974
        %1976 = vmatmul.bf16.gmra.mxu0 %v1915
        %v1977 = vpop.f32.mrf.mxu0
        %v1978 = vadd.f32 0.0, %v1977
        %v1979 = vpop.f32.mrf.mxu0
        %v1980 = vadd.f32 0.0, %v1979
        %1981 = vmatmul.bf16.gmra.mxu0 %v1917
        %v1982 = vpop.f32.mrf.mxu0
        %v1983 = vadd.f32 0.0, %v1982
        %v1984 = vpop.f32.mrf.mxu0
        %v1985 = vadd.f32 0.0, %v1984
        %1986 = vmatmul.bf16.gmra.mxu0 %v1919
        %v1987 = vpop.f32.mrf.mxu0
        %v1988 = vadd.f32 0.0, %v1987
        %v1989 = vpop.f32.mrf.mxu0
        %v1990 = vadd.f32 0.0, %v1989
        %1991 = vmatmul.bf16.gmra.mxu0 %v1921
        %v1992 = vpop.f32.mrf.mxu0
        %v1993 = vadd.f32 0.0, %v1992
        %v1994 = vpop.f32.mrf.mxu0
        %v1995 = vadd.f32 0.0, %v1994
        %1996 = vmatmul.bf16.gmra.mxu0 %v1923
        %v1997 = vpop.f32.mrf.mxu0
        %v1998 = vadd.f32 0.0, %v1997
        %v1999 = vpop.f32.mrf.mxu0
        %v2000 = vadd.f32 0.0, %v1999
        %2001 = vmatmul.bf16.gmra.mxu0 %v1925
        %v2002 = vpop.f32.mrf.mxu0
        %v2003 = vadd.f32 0.0, %v2002
        %v2004 = vpop.f32.mrf.mxu0
        %v2005 = vadd.f32 0.0, %v2004
        %2006 = vmatmul.bf16.gmra.mxu0 %v1927
        %v2007 = vpop.f32.mrf.mxu0
        %v2008 = vadd.f32 0.0, %v2007
        %v2009 = vpop.f32.mrf.mxu0
        %v2010 = vadd.f32 0.0, %v2009
        %2011 = vmatmul.bf16.gmra.mxu0 %v1929
        %v2012 = vpop.f32.mrf.mxu0
        %v2013 = vadd.f32 0.0, %v2012
        %v2014 = vpop.f32.mrf.mxu0
        %v2015 = vadd.f32 0.0, %v2014
        %2016 = vmatmul.bf16.gmra.mxu0 %v1931
        %v2017 = vpop.f32.mrf.mxu0
        %v2018 = vadd.f32 0.0, %v2017
        %v2019 = vpop.f32.mrf.mxu0
        %v2020 = vadd.f32 0.0, %v2019
        %2021 = vdwg.mxu0
        %2022 = vmatpush.bf16.msra.mxu0 %v665
        %2023 = vmatpush.bf16.msra.mxu0 %v664
        %2024 = vmatpush.bf16.msra.mxu0 %v663
        %2025 = vmatpush.bf16.msra.mxu0 %v662
        %2026 = vmatpush.bf16.msra.mxu0 %v661
        %2027 = vmatpush.bf16.msra.mxu0 %v660
        %2028 = vmatpush.bf16.msra.mxu0 %v659
        %2029 = vmatpush.bf16.msra.mxu0 %v658
        %2030 = vmatmul.bf16.gmra.mxu0 %v1902
        %v2031 = vpop.f32.mrf.mxu0
        %v2032 = vadd.f32 %v1943, %v2031
        %v2033 = vpop.f32.mrf.mxu0
        %v2034 = vadd.f32 %v1945, %v2033
        %2035 = vmatmul.bf16.gmra.mxu0 %v1904
        %v2036 = vpop.f32.mrf.mxu0
        %v2037 = vadd.f32 %v1948, %v2036
        %v2038 = vpop.f32.mrf.mxu0
        %v2039 = vadd.f32 %v1950, %v2038
        %2040 = vmatmul.bf16.gmra.mxu0 %v1906
        %v2041 = vpop.f32.mrf.mxu0
        %v2042 = vadd.f32 %v1953, %v2041
        %v2043 = vpop.f32.mrf.mxu0
        %v2044 = vadd.f32 %v1955, %v2043
        %2045 = vmatmul.bf16.gmra.mxu0 %v1908
        %v2046 = vpop.f32.mrf.mxu0
        %v2047 = vadd.f32 %v1958, %v2046
        %v2048 = vpop.f32.mrf.mxu0
        %v2049 = vadd.f32 %v1960, %v2048
        %2050 = vmatmul.bf16.gmra.mxu0 %v1910
        %v2051 = vpop.f32.mrf.mxu0
        %v2052 = vadd.f32 %v1963, %v2051
        %v2053 = vpop.f32.mrf.mxu0
        %v2054 = vadd.f32 %v1965, %v2053
        %2055 = vmatmul.bf16.gmra.mxu0 %v1912
        %v2056 = vpop.f32.mrf.mxu0
        %v2057 = vadd.f32 %v1968, %v2056
        %v2058 = vpop.f32.mrf.mxu0
        %v2059 = vadd.f32 %v1970, %v2058
        %2060 = vmatmul.bf16.gmra.mxu0 %v1914
        %v2061 = vpop.f32.mrf.mxu0
        %v2062 = vadd.f32 %v1973, %v2061
        %v2063 = vpop.f32.mrf.mxu0
        %v2064 = vadd.f32 %v1975, %v2063
        %2065 = vmatmul.bf16.gmra.mxu0 %v1916
        %v2066 = vpop.f32.mrf.mxu0
        %v2067 = vadd.f32 %v1978, %v2066
        %v2068 = vpop.f32.mrf.mxu0
        %v2069 = vadd.f32 %v1980, %v2068
        %2070 = vmatmul.bf16.gmra.mxu0 %v1918
        %v2071 = vpop.f32.mrf.mxu0
        %v2072 = vadd.f32 %v1983, %v2071
        %v2073 = vpop.f32.mrf.mxu0
        %v2074 = vadd.f32 %v1985, %v2073
        %2075 = vmatmul.bf16.gmra.mxu0 %v1920
        %v2076 = vpop.f32.mrf.mxu0
        %v2077 = vadd.f32 %v1988, %v2076
        %v2078 = vpop.f32.mrf.mxu0
        %v2079 = vadd.f32 %v1990, %v2078
        %2080 = vmatmul.bf16.gmra.mxu0 %v1922
        %v2081 = vpop.f32.mrf.mxu0
        %v2082 = vadd.f32 %v1993, %v2081
        %v2083 = vpop.f32.mrf.mxu0
        %v2084 = vadd.f32 %v1995, %v2083
        %2085 = vmatmul.bf16.gmra.mxu0 %v1924
        %v2086 = vpop.f32.mrf.mxu0
        %v2087 = vadd.f32 %v1998, %v2086
        %v2088 = vpop.f32.mrf.mxu0
        %v2089 = vadd.f32 %v2000, %v2088
        %2090 = vmatmul.bf16.gmra.mxu0 %v1926
        %v2091 = vpop.f32.mrf.mxu0
        %v2092 = vadd.f32 %v2003, %v2091
        %v2093 = vpop.f32.mrf.mxu0
        %v2094 = vadd.f32 %v2005, %v2093
        %2095 = vmatmul.bf16.gmra.mxu0 %v1928
        %v2096 = vpop.f32.mrf.mxu0
        %v2097 = vadd.f32 %v2008, %v2096
        %v2098 = vpop.f32.mrf.mxu0
        %v2099 = vadd.f32 %v2010, %v2098
        %2100 = vmatmul.bf16.gmra.mxu0 %v1930
        %v2101 = vpop.f32.mrf.mxu0
        %v2102 = vadd.f32 %v2013, %v2101
        %v2103 = vpop.f32.mrf.mxu0
        %v2104 = vadd.f32 %v2015, %v2103
        %2105 = vmatmul.bf16.gmra.mxu0 %v1932
        %v2106 = vpop.f32.mrf.mxu0
        %v2107 = vadd.f32 %v2018, %v2106
        %v2108 = vpop.f32.mrf.mxu0
        %v2109 = vadd.f32 %v2020, %v2108
        %2110 = vdwg.mxu0
        %v2111 = vadd.f32 %v1869, %v2032
        %v2112 = vadd.f32 %v1870, %v2034
        %v2113 = vadd.f32 %v1871, %v2037
        %v2114 = vadd.f32 %v1872, %v2039
        %v2115 = vadd.f32 %v1873, %v2042
        %v2116 = vadd.f32 %v1874, %v2044
        %v2117 = vadd.f32 %v1875, %v2047
        %v2118 = vadd.f32 %v1876, %v2049
        %v2119 = vadd.f32 %v1877, %v2052
        %v2120 = vadd.f32 %v1878, %v2054
        %v2121 = vadd.f32 %v1879, %v2057
        %v2122 = vadd.f32 %v1880, %v2059
        %v2123 = vadd.f32 %v1881, %v2062
        %v2124 = vadd.f32 %v1882, %v2064
        %v2125 = vadd.f32 %v1883, %v2067
        %v2126 = vadd.f32 %v1884, %v2069
        %v2127 = vadd.f32 %v1885, %v2072
        %v2128 = vadd.f32 %v1886, %v2074
        %v2129 = vadd.f32 %v1887, %v2077
        %v2130 = vadd.f32 %v1888, %v2079
        %v2131 = vadd.f32 %v1889, %v2082
        %v2132 = vadd.f32 %v1890, %v2084
        %v2133 = vadd.f32 %v1891, %v2087
        %v2134 = vadd.f32 %v1892, %v2089
        %v2135 = vadd.f32 %v1893, %v2092
        %v2136 = vadd.f32 %v1894, %v2094
        %v2137 = vadd.f32 %v1895, %v2097
        %v2138 = vadd.f32 %v1896, %v2099
        %v2139 = vadd.f32 %v1897, %v2102
        %v2140 = vadd.f32 %v1898, %v2104
        %v2141 = vadd.f32 %v1899, %v2107
        %v2142 = vadd.f32 %v1900, %v2109
        %2143 = vst [vmem:[#allocation5] sm:$0xff] %v2111
        %2144 = vst [vmem:[#allocation5 + $0x8] sm:$0xff] %v2112
        %2145 = vst [vmem:[#allocation5 + $0x10] sm:$0xff] %v2113
        %2146 = vst [vmem:[#allocation5 + $0x18] sm:$0xff] %v2114
        %2147 = vst [vmem:[#allocation5 + $0x20] sm:$0xff] %v2115
        %2148 = vst [vmem:[#allocation5 + $0x28] sm:$0xff] %v2116
        %2149 = vst [vmem:[#allocation5 + $0x30] sm:$0xff] %v2117
        %2150 = vst [vmem:[#allocation5 + $0x38] sm:$0xff] %v2118
        %2151 = vst [vmem:[#allocation5 + $0x40] sm:$0xff] %v2119
        %2152 = vst [vmem:[#allocation5 + $0x48] sm:$0xff] %v2120
        %2153 = vst [vmem:[#allocation5 + $0x50] sm:$0xff] %v2121
        %2154 = vst [vmem:[#allocation5 + $0x58] sm:$0xff] %v2122
        %2155 = vst [vmem:[#allocation5 + $0x60] sm:$0xff] %v2123
        %2156 = vst [vmem:[#allocation5 + $0x68] sm:$0xff] %v2124
        %2157 = vst [vmem:[#allocation5 + $0x70] sm:$0xff] %v2125
        %2158 = vst [vmem:[#allocation5 + $0x78] sm:$0xff] %v2126
        %2159 = vst [vmem:[#allocation5 + $0x80] sm:$0xff] %v2127
        %2160 = vst [vmem:[#allocation5 + $0x88] sm:$0xff] %v2128
        %2161 = vst [vmem:[#allocation5 + $0x90] sm:$0xff] %v2129
        %2162 = vst [vmem:[#allocation5 + $0x98] sm:$0xff] %v2130
        %2163 = vst [vmem:[#allocation5 + $0xa0] sm:$0xff] %v2131
        %2164 = vst [vmem:[#allocation5 + $0xa8] sm:$0xff] %v2132
        %2165 = vst [vmem:[#allocation5 + $0xb0] sm:$0xff] %v2133
        %2166 = vst [vmem:[#allocation5 + $0xb8] sm:$0xff] %v2134
        %2167 = vst [vmem:[#allocation5 + $0xc0] sm:$0xff] %v2135
        %2168 = vst [vmem:[#allocation5 + $0xc8] sm:$0xff] %v2136
        %2169 = vst [vmem:[#allocation5 + $0xd0] sm:$0xff] %v2137
        %2170 = vst [vmem:[#allocation5 + $0xd8] sm:$0xff] %v2138
        %2171 = vst [vmem:[#allocation5 + $0xe0] sm:$0xff] %v2139
        %2172 = vst [vmem:[#allocation5 + $0xe8] sm:$0xff] %v2140
        %2173 = vst [vmem:[#allocation5 + $0xf0] sm:$0xff] %v2141
        %2174 = vst [vmem:[#allocation5 + $0xf8] sm:$0xff] %v2142
        %2175 = vst.msk [vmem:[#allocation3] sm:$0xff] %vm1644, %v1068
        %2176 = vst.msk [vmem:[#allocation3 + $0x8] sm:$0xff] %vm1644, %v1069
        %2177 = vst.msk [vmem:[#allocation3 + $0x10] sm:$0xff] %vm1644, %v1070
        %2178 = vst.msk [vmem:[#allocation3 + $0x18] sm:$0xff] %vm1644, %v1071
        %2179 = vst.msk [vmem:[#allocation3 + $0x20] sm:$0xff] %vm1644, %v1072
        %2180 = vst.msk [vmem:[#allocation3 + $0x28] sm:$0xff] %vm1644, %v1073
        %2181 = vst.msk [vmem:[#allocation3 + $0x30] sm:$0xff] %vm1644, %v1074
        %2182 = vst.msk [vmem:[#allocation3 + $0x38] sm:$0xff] %vm1644, %v1075
        %2183 = vst.msk [vmem:[#allocation3 + $0x40] sm:$0xff] %vm1644, %v1076
        %2184 = vst.msk [vmem:[#allocation3 + $0x48] sm:$0xff] %vm1644, %v1077
        %2185 = vst.msk [vmem:[#allocation3 + $0x50] sm:$0xff] %vm1644, %v1078
        %2186 = vst.msk [vmem:[#allocation3 + $0x58] sm:$0xff] %vm1644, %v1079
        %2187 = vst.msk [vmem:[#allocation3 + $0x60] sm:$0xff] %vm1644, %v1080
        %2188 = vst.msk [vmem:[#allocation3 + $0x68] sm:$0xff] %vm1644, %v1081
        %2189 = vst.msk [vmem:[#allocation3 + $0x70] sm:$0xff] %vm1644, %v1082
        %2190 = vst.msk [vmem:[#allocation3 + $0x78] sm:$0xff] %vm1644, %v1083
        %2191 = vst.msk [vmem:[#allocation3 + $0x80] sm:$0xff] %vm1644, %v1084
        %2192 = vst.msk [vmem:[#allocation3 + $0x88] sm:$0xff] %vm1644, %v1085
        %2193 = vst.msk [vmem:[#allocation3 + $0x90] sm:$0xff] %vm1644, %v1086
        %2194 = vst.msk [vmem:[#allocation3 + $0x98] sm:$0xff] %vm1644, %v1087
        %2195 = vst.msk [vmem:[#allocation3 + $0xa0] sm:$0xff] %vm1644, %v1088
        %2196 = vst.msk [vmem:[#allocation3 + $0xa8] sm:$0xff] %vm1644, %v1089
        %2197 = vst.msk [vmem:[#allocation3 + $0xb0] sm:$0xff] %vm1644, %v1090
        %2198 = vst.msk [vmem:[#allocation3 + $0xb8] sm:$0xff] %vm1644, %v1091
        %2199 = vst.msk [vmem:[#allocation3 + $0xc0] sm:$0xff] %vm1644, %v1092
        %2200 = vst.msk [vmem:[#allocation3 + $0xc8] sm:$0xff] %vm1644, %v1093
        %2201 = vst.msk [vmem:[#allocation3 + $0xd0] sm:$0xff] %vm1644, %v1094
        %2202 = vst.msk [vmem:[#allocation3 + $0xd8] sm:$0xff] %vm1644, %v1095
        %2203 = vst.msk [vmem:[#allocation3 + $0xe0] sm:$0xff] %vm1644, %v1096
        %2204 = vst.msk [vmem:[#allocation3 + $0xe8] sm:$0xff] %vm1644, %v1097
        %2205 = vst.msk [vmem:[#allocation3 + $0xf0] sm:$0xff] %vm1644, %v1098
        %2206 = vst.msk [vmem:[#allocation3 + $0xf8] sm:$0xff] %vm1644, %v1099
        %p2207 = scmp.eq.s32.totalorder %s30, 1
        // Predicated region
        $region49: #{tpu_custom_call.1} parent=31 // pred_check
          %p2208 = pneg %p2207
        $region50: #{tpu_custom_call.1} parent=31 // pred_check_branch
          %2210 = sbr.rel (%p2208) target = $region52
        $region51: #{tpu_custom_call.1} parent=31 // pred_region
          %v2211 = vld [vmem:[#allocation5] sm:$0xff]
          %v2212 = vld [vmem:[#allocation5 + $0x8] sm:$0xff]
          %v2213 = vld [vmem:[#allocation5 + $0x10] sm:$0xff]
          %v2214 = vld [vmem:[#allocation5 + $0x18] sm:$0xff]
          %v2215 = vld [vmem:[#allocation5 + $0x20] sm:$0xff]
          %v2216 = vld [vmem:[#allocation5 + $0x28] sm:$0xff]
          %v2217 = vld [vmem:[#allocation5 + $0x30] sm:$0xff]
          %v2218 = vld [vmem:[#allocation5 + $0x38] sm:$0xff]
          %v2219 = vld [vmem:[#allocation5 + $0x40] sm:$0xff]
          %v2220 = vld [vmem:[#allocation5 + $0x48] sm:$0xff]
          %v2221 = vld [vmem:[#allocation5 + $0x50] sm:$0xff]
          %v2222 = vld [vmem:[#allocation5 + $0x58] sm:$0xff]
          %v2223 = vld [vmem:[#allocation5 + $0x60] sm:$0xff]
          %v2224 = vld [vmem:[#allocation5 + $0x68] sm:$0xff]
          %v2225 = vld [vmem:[#allocation5 + $0x70] sm:$0xff]
          %v2226 = vld [vmem:[#allocation5 + $0x78] sm:$0xff]
          %v2227 = vld [vmem:[#allocation5 + $0x80] sm:$0xff]
          %v2228 = vld [vmem:[#allocation5 + $0x88] sm:$0xff]
          %v2229 = vld [vmem:[#allocation5 + $0x90] sm:$0xff]
          %v2230 = vld [vmem:[#allocation5 + $0x98] sm:$0xff]
          %v2231 = vld [vmem:[#allocation5 + $0xa0] sm:$0xff]
          %v2232 = vld [vmem:[#allocation5 + $0xa8] sm:$0xff]
          %v2233 = vld [vmem:[#allocation5 + $0xb0] sm:$0xff]
          %v2234 = vld [vmem:[#allocation5 + $0xb8] sm:$0xff]
          %v2235 = vld [vmem:[#allocation5 + $0xc0] sm:$0xff]
          %v2236 = vld [vmem:[#allocation5 + $0xc8] sm:$0xff]
          %v2237 = vld [vmem:[#allocation5 + $0xd0] sm:$0xff]
          %v2238 = vld [vmem:[#allocation5 + $0xd8] sm:$0xff]
          %v2239 = vld [vmem:[#allocation5 + $0xe0] sm:$0xff]
          %v2240 = vld [vmem:[#allocation5 + $0xe8] sm:$0xff]
          %v2241 = vld [vmem:[#allocation5 + $0xf0] sm:$0xff]
          %v2242 = vld [vmem:[#allocation5 + $0xf8] sm:$0xff]
          %v2243 = vld [vmem:[#allocation4] sm:$0xff]
          %v2244 = vld [vmem:[#allocation4 + $0x8] sm:$0xff]
          %v2245 = vld [vmem:[#allocation4 + $0x10] sm:$0xff]
          %v2246 = vld [vmem:[#allocation4 + $0x18] sm:$0xff]
          %v2247 = vld [vmem:[#allocation4 + $0x20] sm:$0xff]
          %v2248 = vld [vmem:[#allocation4 + $0x28] sm:$0xff]
          %v2249 = vld [vmem:[#allocation4 + $0x30] sm:$0xff]
          %v2250 = vld [vmem:[#allocation4 + $0x38] sm:$0xff]
          %v2251 = vld [vmem:[#allocation4 + $0x40] sm:$0xff]
          %v2252 = vld [vmem:[#allocation4 + $0x48] sm:$0xff]
          %v2253 = vld [vmem:[#allocation4 + $0x50] sm:$0xff]
          %v2254 = vld [vmem:[#allocation4 + $0x58] sm:$0xff]
          %v2255 = vld [vmem:[#allocation4 + $0x60] sm:$0xff]
          %v2256 = vld [vmem:[#allocation4 + $0x68] sm:$0xff]
          %v2257 = vld [vmem:[#allocation4 + $0x70] sm:$0xff]
          %v2258 = vld [vmem:[#allocation4 + $0x78] sm:$0xff]
          %v2259 = vld [vmem:[#allocation4 + $0x80] sm:$0xff]
          %v2260 = vld [vmem:[#allocation4 + $0x88] sm:$0xff]
          %v2261 = vld [vmem:[#allocation4 + $0x90] sm:$0xff]
          %v2262 = vld [vmem:[#allocation4 + $0x98] sm:$0xff]
          %v2263 = vld [vmem:[#allocation4 + $0xa0] sm:$0xff]
          %v2264 = vld [vmem:[#allocation4 + $0xa8] sm:$0xff]
          %v2265 = vld [vmem:[#allocation4 + $0xb0] sm:$0xff]
          %v2266 = vld [vmem:[#allocation4 + $0xb8] sm:$0xff]
          %v2267 = vld [vmem:[#allocation4 + $0xc0] sm:$0xff]
          %v2268 = vld [vmem:[#allocation4 + $0xc8] sm:$0xff]
          %v2269 = vld [vmem:[#allocation4 + $0xd0] sm:$0xff]
          %v2270 = vld [vmem:[#allocation4 + $0xd8] sm:$0xff]
          %v2271 = vld [vmem:[#allocation4 + $0xe0] sm:$0xff]
          %v2272 = vld [vmem:[#allocation4 + $0xe8] sm:$0xff]
          %v2273 = vld [vmem:[#allocation4 + $0xf0] sm:$0xff]
          %v2274 = vld [vmem:[#allocation4 + $0xf8] sm:$0xff]
          %2276 = vset.pattern.permute.xlu0 0
          %2277 = vperm.xlu0 %2276, %v2243
          %v2278 = vpop.permute.xlu0 %2277
          %2281 = vset.pattern.permute.xlu0 0
          %2282 = vperm.xlu0 %2281, %v2244
          %v2283 = vpop.permute.xlu0 %2282
          %2286 = vset.pattern.permute.xlu0 0
          %2287 = vperm.xlu0 %2286, %v2245
          %v2288 = vpop.permute.xlu0 %2287
          %2291 = vset.pattern.permute.xlu0 0
          %2292 = vperm.xlu0 %2291, %v2246
          %v2293 = vpop.permute.xlu0 %2292
          %2296 = vset.pattern.permute.xlu0 0
          %2297 = vperm.xlu0 %2296, %v2247
          %v2298 = vpop.permute.xlu0 %2297
          %2301 = vset.pattern.permute.xlu0 0
          %2302 = vperm.xlu0 %2301, %v2248
          %v2303 = vpop.permute.xlu0 %2302
          %2306 = vset.pattern.permute.xlu0 0
          %2307 = vperm.xlu0 %2306, %v2249
          %v2308 = vpop.permute.xlu0 %2307
          %2311 = vset.pattern.permute.xlu0 0
          %2312 = vperm.xlu0 %2311, %v2250
          %v2313 = vpop.permute.xlu0 %2312
          %2316 = vset.pattern.permute.xlu0 0
          %2317 = vperm.xlu0 %2316, %v2251
          %v2318 = vpop.permute.xlu0 %2317
          %2321 = vset.pattern.permute.xlu0 0
          %2322 = vperm.xlu0 %2321, %v2252
          %v2323 = vpop.permute.xlu0 %2322
          %2326 = vset.pattern.permute.xlu0 0
          %2327 = vperm.xlu0 %2326, %v2253
          %v2328 = vpop.permute.xlu0 %2327
          %2331 = vset.pattern.permute.xlu0 0
          %2332 = vperm.xlu0 %2331, %v2254
          %v2333 = vpop.permute.xlu0 %2332
          %2336 = vset.pattern.permute.xlu0 0
          %2337 = vperm.xlu0 %2336, %v2255
          %v2338 = vpop.permute.xlu0 %2337
          %2341 = vset.pattern.permute.xlu0 0
          %2342 = vperm.xlu0 %2341, %v2256
          %v2343 = vpop.permute.xlu0 %2342
          %2346 = vset.pattern.permute.xlu0 0
          %2347 = vperm.xlu0 %2346, %v2257
          %v2348 = vpop.permute.xlu0 %2347
          %2351 = vset.pattern.permute.xlu0 0
          %2352 = vperm.xlu0 %2351, %v2258
          %v2353 = vpop.permute.xlu0 %2352
          %2356 = vset.pattern.permute.xlu0 0
          %2357 = vperm.xlu0 %2356, %v2259
          %v2358 = vpop.permute.xlu0 %2357
          %2361 = vset.pattern.permute.xlu0 0
          %2362 = vperm.xlu0 %2361, %v2260
          %v2363 = vpop.permute.xlu0 %2362
          %2366 = vset.pattern.permute.xlu0 0
          %2367 = vperm.xlu0 %2366, %v2261
          %v2368 = vpop.permute.xlu0 %2367
          %2371 = vset.pattern.permute.xlu0 0
          %2372 = vperm.xlu0 %2371, %v2262
          %v2373 = vpop.permute.xlu0 %2372
          %2376 = vset.pattern.permute.xlu0 0
          %2377 = vperm.xlu0 %2376, %v2263
          %v2378 = vpop.permute.xlu0 %2377
          %2381 = vset.pattern.permute.xlu0 0
          %2382 = vperm.xlu0 %2381, %v2264
          %v2383 = vpop.permute.xlu0 %2382
          %2386 = vset.pattern.permute.xlu0 0
          %2387 = vperm.xlu0 %2386, %v2265
          %v2388 = vpop.permute.xlu0 %2387
          %2391 = vset.pattern.permute.xlu0 0
          %2392 = vperm.xlu0 %2391, %v2266
          %v2393 = vpop.permute.xlu0 %2392
          %2396 = vset.pattern.permute.xlu0 0
          %2397 = vperm.xlu0 %2396, %v2267
          %v2398 = vpop.permute.xlu0 %2397
          %2401 = vset.pattern.permute.xlu0 0
          %2402 = vperm.xlu0 %2401, %v2268
          %v2403 = vpop.permute.xlu0 %2402
          %2406 = vset.pattern.permute.xlu0 0
          %2407 = vperm.xlu0 %2406, %v2269
          %v2408 = vpop.permute.xlu0 %2407
          %2411 = vset.pattern.permute.xlu0 0
          %2412 = vperm.xlu0 %2411, %v2270
          %v2413 = vpop.permute.xlu0 %2412
          %2416 = vset.pattern.permute.xlu0 0
          %2417 = vperm.xlu0 %2416, %v2271
          %v2418 = vpop.permute.xlu0 %2417
          %2421 = vset.pattern.permute.xlu0 0
          %2422 = vperm.xlu0 %2421, %v2272
          %v2423 = vpop.permute.xlu0 %2422
          %2426 = vset.pattern.permute.xlu0 0
          %2427 = vperm.xlu0 %2426, %v2273
          %v2428 = vpop.permute.xlu0 %2427
          %2431 = vset.pattern.permute.xlu0 0
          %2432 = vperm.xlu0 %2431, %v2274
          %v2433 = vpop.permute.xlu0 %2432
          %v2435 = vrcp.pop %v2278
          %v2436 = vmul.f32 %v2278, %v2435
          %v2437 = vsub.f32 1.0, %v2436
          %v2438 = vmul.f32 %v2435, %v2437
          %v2439 = vadd.f32 %v2435, %v2438
          %vm2440 = vweird.f32 %v2278
          %vm2441 = vweird.f32 %v2435
          %vm2442 = vmor %vm2440, %vm2441
          %v2443 = vsel %vm2442, %v2435, %v2439
          %v2444 = vand.u32 2147483647, %v2278
          %vm2445 = vcmp.eq.f32.partialorder %v2444, 8.507059e+37
          %v2446 = vand.u32 %v2278, 2147483648
          %v2447 = vor.u32 1.1754944e-38, %v2446
          %v2448 = vsel %vm2445, %v2447, %v2443
          %v2449 = vmul.f32 %v2211, %v2448
          %v2450 = vrcp.pop %v2283
          %v2451 = vmul.f32 %v2283, %v2450
          %v2452 = vsub.f32 1.0, %v2451
          %v2453 = vmul.f32 %v2450, %v2452
          %v2454 = vadd.f32 %v2450, %v2453
          %vm2455 = vweird.f32 %v2283
          %vm2456 = vweird.f32 %v2450
          %vm2457 = vmor %vm2455, %vm2456
          %v2458 = vsel %vm2457, %v2450, %v2454
          %v2459 = vand.u32 2147483647, %v2283
          %vm2460 = vcmp.eq.f32.partialorder %v2459, 8.507059e+37
          %v2461 = vand.u32 %v2283, 2147483648
          %v2462 = vor.u32 1.1754944e-38, %v2461
          %v2463 = vsel %vm2460, %v2462, %v2458
          %v2464 = vmul.f32 %v2212, %v2463
          %v2465 = vrcp.pop %v2288
          %v2466 = vmul.f32 %v2288, %v2465
          %v2467 = vsub.f32 1.0, %v2466
          %v2468 = vmul.f32 %v2465, %v2467
          %v2469 = vadd.f32 %v2465, %v2468
          %vm2470 = vweird.f32 %v2288
          %vm2471 = vweird.f32 %v2465
          %vm2472 = vmor %vm2470, %vm2471
          %v2473 = vsel %vm2472, %v2465, %v2469
          %v2474 = vand.u32 2147483647, %v2288
          %vm2475 = vcmp.eq.f32.partialorder %v2474, 8.507059e+37
          %v2476 = vand.u32 %v2288, 2147483648
          %v2477 = vor.u32 1.1754944e-38, %v2476
          %v2478 = vsel %vm2475, %v2477, %v2473
          %v2479 = vmul.f32 %v2213, %v2478
          %v2480 = vrcp.pop %v2293
          %v2481 = vmul.f32 %v2293, %v2480
          %v2482 = vsub.f32 1.0, %v2481
          %v2483 = vmul.f32 %v2480, %v2482
          %v2484 = vadd.f32 %v2480, %v2483
          %vm2485 = vweird.f32 %v2293
          %vm2486 = vweird.f32 %v2480
          %vm2487 = vmor %vm2485, %vm2486
          %v2488 = vsel %vm2487, %v2480, %v2484
          %v2489 = vand.u32 2147483647, %v2293
          %vm2490 = vcmp.eq.f32.partialorder %v2489, 8.507059e+37
          %v2491 = vand.u32 %v2293, 2147483648
          %v2492 = vor.u32 1.1754944e-38, %v2491
          %v2493 = vsel %vm2490, %v2492, %v2488
          %v2494 = vmul.f32 %v2214, %v2493
          %v2495 = vrcp.pop %v2298
          %v2496 = vmul.f32 %v2298, %v2495
          %v2497 = vsub.f32 1.0, %v2496
          %v2498 = vmul.f32 %v2495, %v2497
          %v2499 = vadd.f32 %v2495, %v2498
          %vm2500 = vweird.f32 %v2298
          %vm2501 = vweird.f32 %v2495
          %vm2502 = vmor %vm2500, %vm2501
          %v2503 = vsel %vm2502, %v2495, %v2499
          %v2504 = vand.u32 2147483647, %v2298
          %vm2505 = vcmp.eq.f32.partialorder %v2504, 8.507059e+37
          %v2506 = vand.u32 %v2298, 2147483648
          %v2507 = vor.u32 1.1754944e-38, %v2506
          %v2508 = vsel %vm2505, %v2507, %v2503
          %v2509 = vmul.f32 %v2215, %v2508
          %v2510 = vrcp.pop %v2303
          %v2511 = vmul.f32 %v2303, %v2510
          %v2512 = vsub.f32 1.0, %v2511
          %v2513 = vmul.f32 %v2510, %v2512
          %v2514 = vadd.f32 %v2510, %v2513
          %vm2515 = vweird.f32 %v2303
          %vm2516 = vweird.f32 %v2510
          %vm2517 = vmor %vm2515, %vm2516
          %v2518 = vsel %vm2517, %v2510, %v2514
          %v2519 = vand.u32 2147483647, %v2303
          %vm2520 = vcmp.eq.f32.partialorder %v2519, 8.507059e+37
          %v2521 = vand.u32 %v2303, 2147483648
          %v2522 = vor.u32 1.1754944e-38, %v2521
          %v2523 = vsel %vm2520, %v2522, %v2518
          %v2524 = vmul.f32 %v2216, %v2523
          %v2525 = vrcp.pop %v2308
          %v2526 = vmul.f32 %v2308, %v2525
          %v2527 = vsub.f32 1.0, %v2526
          %v2528 = vmul.f32 %v2525, %v2527
          %v2529 = vadd.f32 %v2525, %v2528
          %vm2530 = vweird.f32 %v2308
          %vm2531 = vweird.f32 %v2525
          %vm2532 = vmor %vm2530, %vm2531
          %v2533 = vsel %vm2532, %v2525, %v2529
          %v2534 = vand.u32 2147483647, %v2308
          %vm2535 = vcmp.eq.f32.partialorder %v2534, 8.507059e+37
          %v2536 = vand.u32 %v2308, 2147483648
          %v2537 = vor.u32 1.1754944e-38, %v2536
          %v2538 = vsel %vm2535, %v2537, %v2533
          %v2539 = vmul.f32 %v2217, %v2538
          %v2540 = vrcp.pop %v2313
          %v2541 = vmul.f32 %v2313, %v2540
          %v2542 = vsub.f32 1.0, %v2541
          %v2543 = vmul.f32 %v2540, %v2542
          %v2544 = vadd.f32 %v2540, %v2543
          %vm2545 = vweird.f32 %v2313
          %vm2546 = vweird.f32 %v2540
          %vm2547 = vmor %vm2545, %vm2546
          %v2548 = vsel %vm2547, %v2540, %v2544
          %v2549 = vand.u32 2147483647, %v2313
          %vm2550 = vcmp.eq.f32.partialorder %v2549, 8.507059e+37
          %v2551 = vand.u32 %v2313, 2147483648
          %v2552 = vor.u32 1.1754944e-38, %v2551
          %v2553 = vsel %vm2550, %v2552, %v2548
          %v2554 = vmul.f32 %v2218, %v2553
          %v2555 = vrcp.pop %v2318
          %v2556 = vmul.f32 %v2318, %v2555
          %v2557 = vsub.f32 1.0, %v2556
          %v2558 = vmul.f32 %v2555, %v2557
          %v2559 = vadd.f32 %v2555, %v2558
          %vm2560 = vweird.f32 %v2318
          %vm2561 = vweird.f32 %v2555
          %vm2562 = vmor %vm2560, %vm2561
          %v2563 = vsel %vm2562, %v2555, %v2559
          %v2564 = vand.u32 2147483647, %v2318
          %vm2565 = vcmp.eq.f32.partialorder %v2564, 8.507059e+37
          %v2566 = vand.u32 %v2318, 2147483648
          %v2567 = vor.u32 1.1754944e-38, %v2566
          %v2568 = vsel %vm2565, %v2567, %v2563
          %v2569 = vmul.f32 %v2219, %v2568
          %v2570 = vrcp.pop %v2323
          %v2571 = vmul.f32 %v2323, %v2570
          %v2572 = vsub.f32 1.0, %v2571
          %v2573 = vmul.f32 %v2570, %v2572
          %v2574 = vadd.f32 %v2570, %v2573
          %vm2575 = vweird.f32 %v2323
          %vm2576 = vweird.f32 %v2570
          %vm2577 = vmor %vm2575, %vm2576
          %v2578 = vsel %vm2577, %v2570, %v2574
          %v2579 = vand.u32 2147483647, %v2323
          %vm2580 = vcmp.eq.f32.partialorder %v2579, 8.507059e+37
          %v2581 = vand.u32 %v2323, 2147483648
          %v2582 = vor.u32 1.1754944e-38, %v2581
          %v2583 = vsel %vm2580, %v2582, %v2578
          %v2584 = vmul.f32 %v2220, %v2583
          %v2585 = vrcp.pop %v2328
          %v2586 = vmul.f32 %v2328, %v2585
          %v2587 = vsub.f32 1.0, %v2586
          %v2588 = vmul.f32 %v2585, %v2587
          %v2589 = vadd.f32 %v2585, %v2588
          %vm2590 = vweird.f32 %v2328
          %vm2591 = vweird.f32 %v2585
          %vm2592 = vmor %vm2590, %vm2591
          %v2593 = vsel %vm2592, %v2585, %v2589
          %v2594 = vand.u32 2147483647, %v2328
          %vm2595 = vcmp.eq.f32.partialorder %v2594, 8.507059e+37
          %v2596 = vand.u32 %v2328, 2147483648
          %v2597 = vor.u32 1.1754944e-38, %v2596
          %v2598 = vsel %vm2595, %v2597, %v2593
          %v2599 = vmul.f32 %v2221, %v2598
          %v2600 = vrcp.pop %v2333
          %v2601 = vmul.f32 %v2333, %v2600
          %v2602 = vsub.f32 1.0, %v2601
          %v2603 = vmul.f32 %v2600, %v2602
          %v2604 = vadd.f32 %v2600, %v2603
          %vm2605 = vweird.f32 %v2333
          %vm2606 = vweird.f32 %v2600
          %vm2607 = vmor %vm2605, %vm2606
          %v2608 = vsel %vm2607, %v2600, %v2604
          %v2609 = vand.u32 2147483647, %v2333
          %vm2610 = vcmp.eq.f32.partialorder %v2609, 8.507059e+37
          %v2611 = vand.u32 %v2333, 2147483648
          %v2612 = vor.u32 1.1754944e-38, %v2611
          %v2613 = vsel %vm2610, %v2612, %v2608
          %v2614 = vmul.f32 %v2222, %v2613
          %v2615 = vrcp.pop %v2338
          %v2616 = vmul.f32 %v2338, %v2615
          %v2617 = vsub.f32 1.0, %v2616
          %v2618 = vmul.f32 %v2615, %v2617
          %v2619 = vadd.f32 %v2615, %v2618
          %vm2620 = vweird.f32 %v2338
          %vm2621 = vweird.f32 %v2615
          %vm2622 = vmor %vm2620, %vm2621
          %v2623 = vsel %vm2622, %v2615, %v2619
          %v2624 = vand.u32 2147483647, %v2338
          %vm2625 = vcmp.eq.f32.partialorder %v2624, 8.507059e+37
          %v2626 = vand.u32 %v2338, 2147483648
          %v2627 = vor.u32 1.1754944e-38, %v2626
          %v2628 = vsel %vm2625, %v2627, %v2623
          %v2629 = vmul.f32 %v2223, %v2628
          %v2630 = vrcp.pop %v2343
          %v2631 = vmul.f32 %v2343, %v2630
          %v2632 = vsub.f32 1.0, %v2631
          %v2633 = vmul.f32 %v2630, %v2632
          %v2634 = vadd.f32 %v2630, %v2633
          %vm2635 = vweird.f32 %v2343
          %vm2636 = vweird.f32 %v2630
          %vm2637 = vmor %vm2635, %vm2636
          %v2638 = vsel %vm2637, %v2630, %v2634
          %v2639 = vand.u32 2147483647, %v2343
          %vm2640 = vcmp.eq.f32.partialorder %v2639, 8.507059e+37
          %v2641 = vand.u32 %v2343, 2147483648
          %v2642 = vor.u32 1.1754944e-38, %v2641
          %v2643 = vsel %vm2640, %v2642, %v2638
          %v2644 = vmul.f32 %v2224, %v2643
          %v2645 = vrcp.pop %v2348
          %v2646 = vmul.f32 %v2348, %v2645
          %v2647 = vsub.f32 1.0, %v2646
          %v2648 = vmul.f32 %v2645, %v2647
          %v2649 = vadd.f32 %v2645, %v2648
          %vm2650 = vweird.f32 %v2348
          %vm2651 = vweird.f32 %v2645
          %vm2652 = vmor %vm2650, %vm2651
          %v2653 = vsel %vm2652, %v2645, %v2649
          %v2654 = vand.u32 2147483647, %v2348
          %vm2655 = vcmp.eq.f32.partialorder %v2654, 8.507059e+37
          %v2656 = vand.u32 %v2348, 2147483648
          %v2657 = vor.u32 1.1754944e-38, %v2656
          %v2658 = vsel %vm2655, %v2657, %v2653
          %v2659 = vmul.f32 %v2225, %v2658
          %v2660 = vrcp.pop %v2353
          %v2661 = vmul.f32 %v2353, %v2660
          %v2662 = vsub.f32 1.0, %v2661
          %v2663 = vmul.f32 %v2660, %v2662
          %v2664 = vadd.f32 %v2660, %v2663
          %vm2665 = vweird.f32 %v2353
          %vm2666 = vweird.f32 %v2660
          %vm2667 = vmor %vm2665, %vm2666
          %v2668 = vsel %vm2667, %v2660, %v2664
          %v2669 = vand.u32 2147483647, %v2353
          %vm2670 = vcmp.eq.f32.partialorder %v2669, 8.507059e+37
          %v2671 = vand.u32 %v2353, 2147483648
          %v2672 = vor.u32 1.1754944e-38, %v2671
          %v2673 = vsel %vm2670, %v2672, %v2668
          %v2674 = vmul.f32 %v2226, %v2673
          %v2675 = vrcp.pop %v2358
          %v2676 = vmul.f32 %v2358, %v2675
          %v2677 = vsub.f32 1.0, %v2676
          %v2678 = vmul.f32 %v2675, %v2677
          %v2679 = vadd.f32 %v2675, %v2678
          %vm2680 = vweird.f32 %v2358
          %vm2681 = vweird.f32 %v2675
          %vm2682 = vmor %vm2680, %vm2681
          %v2683 = vsel %vm2682, %v2675, %v2679
          %v2684 = vand.u32 2147483647, %v2358
          %vm2685 = vcmp.eq.f32.partialorder %v2684, 8.507059e+37
          %v2686 = vand.u32 %v2358, 2147483648
          %v2687 = vor.u32 1.1754944e-38, %v2686
          %v2688 = vsel %vm2685, %v2687, %v2683
          %v2689 = vmul.f32 %v2227, %v2688
          %v2690 = vrcp.pop %v2363
          %v2691 = vmul.f32 %v2363, %v2690
          %v2692 = vsub.f32 1.0, %v2691
          %v2693 = vmul.f32 %v2690, %v2692
          %v2694 = vadd.f32 %v2690, %v2693
          %vm2695 = vweird.f32 %v2363
          %vm2696 = vweird.f32 %v2690
          %vm2697 = vmor %vm2695, %vm2696
          %v2698 = vsel %vm2697, %v2690, %v2694
          %v2699 = vand.u32 2147483647, %v2363
          %vm2700 = vcmp.eq.f32.partialorder %v2699, 8.507059e+37
          %v2701 = vand.u32 %v2363, 2147483648
          %v2702 = vor.u32 1.1754944e-38, %v2701
          %v2703 = vsel %vm2700, %v2702, %v2698
          %v2704 = vmul.f32 %v2228, %v2703
          %v2705 = vrcp.pop %v2368
          %v2706 = vmul.f32 %v2368, %v2705
          %v2707 = vsub.f32 1.0, %v2706
          %v2708 = vmul.f32 %v2705, %v2707
          %v2709 = vadd.f32 %v2705, %v2708
          %vm2710 = vweird.f32 %v2368
          %vm2711 = vweird.f32 %v2705
          %vm2712 = vmor %vm2710, %vm2711
          %v2713 = vsel %vm2712, %v2705, %v2709
          %v2714 = vand.u32 2147483647, %v2368
          %vm2715 = vcmp.eq.f32.partialorder %v2714, 8.507059e+37
          %v2716 = vand.u32 %v2368, 2147483648
          %v2717 = vor.u32 1.1754944e-38, %v2716
          %v2718 = vsel %vm2715, %v2717, %v2713
          %v2719 = vmul.f32 %v2229, %v2718
          %v2720 = vrcp.pop %v2373
          %v2721 = vmul.f32 %v2373, %v2720
          %v2722 = vsub.f32 1.0, %v2721
          %v2723 = vmul.f32 %v2720, %v2722
          %v2724 = vadd.f32 %v2720, %v2723
          %vm2725 = vweird.f32 %v2373
          %vm2726 = vweird.f32 %v2720
          %vm2727 = vmor %vm2725, %vm2726
          %v2728 = vsel %vm2727, %v2720, %v2724
          %v2729 = vand.u32 2147483647, %v2373
          %vm2730 = vcmp.eq.f32.partialorder %v2729, 8.507059e+37
          %v2731 = vand.u32 %v2373, 2147483648
          %v2732 = vor.u32 1.1754944e-38, %v2731
          %v2733 = vsel %vm2730, %v2732, %v2728
          %v2734 = vmul.f32 %v2230, %v2733
          %v2735 = vrcp.pop %v2378
          %v2736 = vmul.f32 %v2378, %v2735
          %v2737 = vsub.f32 1.0, %v2736
          %v2738 = vmul.f32 %v2735, %v2737
          %v2739 = vadd.f32 %v2735, %v2738
          %vm2740 = vweird.f32 %v2378
          %vm2741 = vweird.f32 %v2735
          %vm2742 = vmor %vm2740, %vm2741
          %v2743 = vsel %vm2742, %v2735, %v2739
          %v2744 = vand.u32 2147483647, %v2378
          %vm2745 = vcmp.eq.f32.partialorder %v2744, 8.507059e+37
          %v2746 = vand.u32 %v2378, 2147483648
          %v2747 = vor.u32 1.1754944e-38, %v2746
          %v2748 = vsel %vm2745, %v2747, %v2743
          %v2749 = vmul.f32 %v2231, %v2748
          %v2750 = vrcp.pop %v2383
          %v2751 = vmul.f32 %v2383, %v2750
          %v2752 = vsub.f32 1.0, %v2751
          %v2753 = vmul.f32 %v2750, %v2752
          %v2754 = vadd.f32 %v2750, %v2753
          %vm2755 = vweird.f32 %v2383
          %vm2756 = vweird.f32 %v2750
          %vm2757 = vmor %vm2755, %vm2756
          %v2758 = vsel %vm2757, %v2750, %v2754
          %v2759 = vand.u32 2147483647, %v2383
          %vm2760 = vcmp.eq.f32.partialorder %v2759, 8.507059e+37
          %v2761 = vand.u32 %v2383, 2147483648
          %v2762 = vor.u32 1.1754944e-38, %v2761
          %v2763 = vsel %vm2760, %v2762, %v2758
          %v2764 = vmul.f32 %v2232, %v2763
          %v2765 = vrcp.pop %v2388
          %v2766 = vmul.f32 %v2388, %v2765
          %v2767 = vsub.f32 1.0, %v2766
          %v2768 = vmul.f32 %v2765, %v2767
          %v2769 = vadd.f32 %v2765, %v2768
          %vm2770 = vweird.f32 %v2388
          %vm2771 = vweird.f32 %v2765
          %vm2772 = vmor %vm2770, %vm2771
          %v2773 = vsel %vm2772, %v2765, %v2769
          %v2774 = vand.u32 2147483647, %v2388
          %vm2775 = vcmp.eq.f32.partialorder %v2774, 8.507059e+37
          %v2776 = vand.u32 %v2388, 2147483648
          %v2777 = vor.u32 1.1754944e-38, %v2776
          %v2778 = vsel %vm2775, %v2777, %v2773
          %v2779 = vmul.f32 %v2233, %v2778
          %v2780 = vrcp.pop %v2393
          %v2781 = vmul.f32 %v2393, %v2780
          %v2782 = vsub.f32 1.0, %v2781
          %v2783 = vmul.f32 %v2780, %v2782
          %v2784 = vadd.f32 %v2780, %v2783
          %vm2785 = vweird.f32 %v2393
          %vm2786 = vweird.f32 %v2780
          %vm2787 = vmor %vm2785, %vm2786
          %v2788 = vsel %vm2787, %v2780, %v2784
          %v2789 = vand.u32 2147483647, %v2393
          %vm2790 = vcmp.eq.f32.partialorder %v2789, 8.507059e+37
          %v2791 = vand.u32 %v2393, 2147483648
          %v2792 = vor.u32 1.1754944e-38, %v2791
          %v2793 = vsel %vm2790, %v2792, %v2788
          %v2794 = vmul.f32 %v2234, %v2793
          %v2795 = vrcp.pop %v2398
          %v2796 = vmul.f32 %v2398, %v2795
          %v2797 = vsub.f32 1.0, %v2796
          %v2798 = vmul.f32 %v2795, %v2797
          %v2799 = vadd.f32 %v2795, %v2798
          %vm2800 = vweird.f32 %v2398
          %vm2801 = vweird.f32 %v2795
          %vm2802 = vmor %vm2800, %vm2801
          %v2803 = vsel %vm2802, %v2795, %v2799
          %v2804 = vand.u32 2147483647, %v2398
          %vm2805 = vcmp.eq.f32.partialorder %v2804, 8.507059e+37
          %v2806 = vand.u32 %v2398, 2147483648
          %v2807 = vor.u32 1.1754944e-38, %v2806
          %v2808 = vsel %vm2805, %v2807, %v2803
          %v2809 = vmul.f32 %v2235, %v2808
          %v2810 = vrcp.pop %v2403
          %v2811 = vmul.f32 %v2403, %v2810
          %v2812 = vsub.f32 1.0, %v2811
          %v2813 = vmul.f32 %v2810, %v2812
          %v2814 = vadd.f32 %v2810, %v2813
          %vm2815 = vweird.f32 %v2403
          %vm2816 = vweird.f32 %v2810
          %vm2817 = vmor %vm2815, %vm2816
          %v2818 = vsel %vm2817, %v2810, %v2814
          %v2819 = vand.u32 2147483647, %v2403
          %vm2820 = vcmp.eq.f32.partialorder %v2819, 8.507059e+37
          %v2821 = vand.u32 %v2403, 2147483648
          %v2822 = vor.u32 1.1754944e-38, %v2821
          %v2823 = vsel %vm2820, %v2822, %v2818
          %v2824 = vmul.f32 %v2236, %v2823
          %v2825 = vrcp.pop %v2408
          %v2826 = vmul.f32 %v2408, %v2825
          %v2827 = vsub.f32 1.0, %v2826
          %v2828 = vmul.f32 %v2825, %v2827
          %v2829 = vadd.f32 %v2825, %v2828
          %vm2830 = vweird.f32 %v2408
          %vm2831 = vweird.f32 %v2825
          %vm2832 = vmor %vm2830, %vm2831
          %v2833 = vsel %vm2832, %v2825, %v2829
          %v2834 = vand.u32 2147483647, %v2408
          %vm2835 = vcmp.eq.f32.partialorder %v2834, 8.507059e+37
          %v2836 = vand.u32 %v2408, 2147483648
          %v2837 = vor.u32 1.1754944e-38, %v2836
          %v2838 = vsel %vm2835, %v2837, %v2833
          %v2839 = vmul.f32 %v2237, %v2838
          %v2840 = vrcp.pop %v2413
          %v2841 = vmul.f32 %v2413, %v2840
          %v2842 = vsub.f32 1.0, %v2841
          %v2843 = vmul.f32 %v2840, %v2842
          %v2844 = vadd.f32 %v2840, %v2843
          %vm2845 = vweird.f32 %v2413
          %vm2846 = vweird.f32 %v2840
          %vm2847 = vmor %vm2845, %vm2846
          %v2848 = vsel %vm2847, %v2840, %v2844
          %v2849 = vand.u32 2147483647, %v2413
          %vm2850 = vcmp.eq.f32.partialorder %v2849, 8.507059e+37
          %v2851 = vand.u32 %v2413, 2147483648
          %v2852 = vor.u32 1.1754944e-38, %v2851
          %v2853 = vsel %vm2850, %v2852, %v2848
          %v2854 = vmul.f32 %v2238, %v2853
          %v2855 = vrcp.pop %v2418
          %v2856 = vmul.f32 %v2418, %v2855
          %v2857 = vsub.f32 1.0, %v2856
          %v2858 = vmul.f32 %v2855, %v2857
          %v2859 = vadd.f32 %v2855, %v2858
          %vm2860 = vweird.f32 %v2418
          %vm2861 = vweird.f32 %v2855
          %vm2862 = vmor %vm2860, %vm2861
          %v2863 = vsel %vm2862, %v2855, %v2859
          %v2864 = vand.u32 2147483647, %v2418
          %vm2865 = vcmp.eq.f32.partialorder %v2864, 8.507059e+37
          %v2866 = vand.u32 %v2418, 2147483648
          %v2867 = vor.u32 1.1754944e-38, %v2866
          %v2868 = vsel %vm2865, %v2867, %v2863
          %v2869 = vmul.f32 %v2239, %v2868
          %v2870 = vrcp.pop %v2423
          %v2871 = vmul.f32 %v2423, %v2870
          %v2872 = vsub.f32 1.0, %v2871
          %v2873 = vmul.f32 %v2870, %v2872
          %v2874 = vadd.f32 %v2870, %v2873
          %vm2875 = vweird.f32 %v2423
          %vm2876 = vweird.f32 %v2870
          %vm2877 = vmor %vm2875, %vm2876
          %v2878 = vsel %vm2877, %v2870, %v2874
          %v2879 = vand.u32 2147483647, %v2423
          %vm2880 = vcmp.eq.f32.partialorder %v2879, 8.507059e+37
          %v2881 = vand.u32 %v2423, 2147483648
          %v2882 = vor.u32 1.1754944e-38, %v2881
          %v2883 = vsel %vm2880, %v2882, %v2878
          %v2884 = vmul.f32 %v2240, %v2883
          %v2885 = vrcp.pop %v2428
          %v2886 = vmul.f32 %v2428, %v2885
          %v2887 = vsub.f32 1.0, %v2886
          %v2888 = vmul.f32 %v2885, %v2887
          %v2889 = vadd.f32 %v2885, %v2888
          %vm2890 = vweird.f32 %v2428
          %vm2891 = vweird.f32 %v2885
          %vm2892 = vmor %vm2890, %vm2891
          %v2893 = vsel %vm2892, %v2885, %v2889
          %v2894 = vand.u32 2147483647, %v2428
          %vm2895 = vcmp.eq.f32.partialorder %v2894, 8.507059e+37
          %v2896 = vand.u32 %v2428, 2147483648
          %v2897 = vor.u32 1.1754944e-38, %v2896
          %v2898 = vsel %vm2895, %v2897, %v2893
          %v2899 = vmul.f32 %v2241, %v2898
          %v2900 = vrcp.pop %v2433
          %v2901 = vmul.f32 %v2433, %v2900
          %v2902 = vsub.f32 1.0, %v2901
          %v2903 = vmul.f32 %v2900, %v2902
          %v2904 = vadd.f32 %v2900, %v2903
          %vm2905 = vweird.f32 %v2433
          %vm2906 = vweird.f32 %v2900
          %vm2907 = vmor %vm2905, %vm2906
          %v2908 = vsel %vm2907, %v2900, %v2904
          %v2909 = vand.u32 2147483647, %v2433
          %vm2910 = vcmp.eq.f32.partialorder %v2909, 8.507059e+37
          %v2911 = vand.u32 %v2433, 2147483648
          %v2912 = vor.u32 1.1754944e-38, %v2911
          %v2913 = vsel %vm2910, %v2912, %v2908
          %v2914 = vmul.f32 %v2242, %v2913
          %2915 = vst [vmem:[%s304] sm:$0xff] %v2449
          %2916 = vst [vmem:[%s304 + $0x8] sm:$0xff] %v2464
          %2917 = vst [vmem:[%s304 + $0x10] sm:$0xff] %v2479
          %2918 = vst [vmem:[%s304 + $0x18] sm:$0xff] %v2494
          %2919 = vst [vmem:[%s304 + $0x20] sm:$0xff] %v2509
          %2920 = vst [vmem:[%s304 + $0x28] sm:$0xff] %v2524
          %2921 = vst [vmem:[%s304 + $0x30] sm:$0xff] %v2539
          %2922 = vst [vmem:[%s304 + $0x38] sm:$0xff] %v2554
          %2923 = vst [vmem:[%s304 + $0x40] sm:$0xff] %v2569
          %2924 = vst [vmem:[%s304 + $0x48] sm:$0xff] %v2584
          %2925 = vst [vmem:[%s304 + $0x50] sm:$0xff] %v2599
          %2926 = vst [vmem:[%s304 + $0x58] sm:$0xff] %v2614
          %2927 = vst [vmem:[%s304 + $0x60] sm:$0xff] %v2629
          %2928 = vst [vmem:[%s304 + $0x68] sm:$0xff] %v2644
          %2929 = vst [vmem:[%s304 + $0x70] sm:$0xff] %v2659
          %2930 = vst [vmem:[%s304 + $0x78] sm:$0xff] %v2674
          %2931 = vst [vmem:[%s304 + $0x80] sm:$0xff] %v2689
          %2932 = vst [vmem:[%s304 + $0x88] sm:$0xff] %v2704
          %2933 = vst [vmem:[%s304 + $0x90] sm:$0xff] %v2719
          %2934 = vst [vmem:[%s304 + $0x98] sm:$0xff] %v2734
          %2935 = vst [vmem:[%s304 + $0xa0] sm:$0xff] %v2749
          %2936 = vst [vmem:[%s304 + $0xa8] sm:$0xff] %v2764
          %2937 = vst [vmem:[%s304 + $0xb0] sm:$0xff] %v2779
          %2938 = vst [vmem:[%s304 + $0xb8] sm:$0xff] %v2794
          %2939 = vst [vmem:[%s304 + $0xc0] sm:$0xff] %v2809
          %2940 = vst [vmem:[%s304 + $0xc8] sm:$0xff] %v2824
          %2941 = vst [vmem:[%s304 + $0xd0] sm:$0xff] %v2839
          %2942 = vst [vmem:[%s304 + $0xd8] sm:$0xff] %v2854
          %2943 = vst [vmem:[%s304 + $0xe0] sm:$0xff] %v2869
          %2944 = vst [vmem:[%s304 + $0xe8] sm:$0xff] %v2884
          %2945 = vst [vmem:[%s304 + $0xf0] sm:$0xff] %v2899
          %2946 = vst [vmem:[%s304 + $0xf8] sm:$0xff] %v2914
        $region52: #{tpu_custom_call.1} parent=31 // pred_fallthru
          _
        %s2947 = sand.u32 %s136, 1
        %s2948 = scalar_lea.sflag [#allocation8], %s2947
        %s2949 = sand.u32 %s136, 1
        %s2950 = smul.addr %s2949, 256
        %s2951 = scalar_lea.vmem [#allocation12], %s2950
        // Predicated region
        $region53: #{tpu_custom_call.1} parent=31 // pred_check
          %p2952 = pneg %p146
        $region54: #{tpu_custom_call.1} parent=31 // pred_check_branch
          %2954 = sbr.rel (%p2952) target = $region56
        $region55: #{tpu_custom_call.1} parent=31 // pred_region
          %s2955 = smul.u32 32, %s29
          %2957 = vsyncadd %s2948, 0
          %s2958 = smul.addr %s28, 64
          %s2959 = sadd.s32 %s2955, %s2958
          %s2960 = smul.addr %s2959, 8
          %s2961 = scalar_lea.hbm %s3, %s2960
          %s2962 = sshll.u32 %s2951, 4
          %s2963 = int_to_ptr.vmem [resolvable:$true] %s2962
          %s2964 = sshll.u32 %s2961, 4
          %s2965 = int_to_ptr.hbm [resolvable:$true] %s2964
          %2970 = dma.vmem_to_hbm [thread:$0]  %s2963, 4096, %s2965, %s2948, 128, 128, 8
        $region56: #{tpu_custom_call.1} parent=31 // pred_fallthru
          _
      $region32: #{tpu_custom_call.1} parent=5 // pred_fallthru
        _
      %p2971 = scmp.le.s32.totalorder 2, %s18
      // Predicated region
      $region57: #{tpu_custom_call.1} parent=5 // pred_check
        %p2972 = pneg %p2971
      $region58: #{tpu_custom_call.1} parent=5 // pred_check_branch
        %2974 = sbr.rel (%p2972) target = $region60
      $region59: #{tpu_custom_call.1} parent=5 // pred_region
        %s2975 = ssub.s32 %s18, 2
        // Predicated region
        $region61: #{tpu_custom_call.1} parent=59 // pred_check
          %p2976 = pneg %p152
        $region62: #{tpu_custom_call.1} parent=59 // pred_check_branch
          %2978 = sbr.rel (%p2976) target = $region64
        $region63: #{tpu_custom_call.1} parent=59 // pred_region
          %s2979 = sand.u32 %s137, 1
          %s2980 = scalar_lea.sflag [#allocation8], %s2979
          %s2981 = sand.u32 %s137, 1
          %s2982 = smul.addr %s2981, 256
          %s2983 = scalar_lea.vmem [#allocation12], %s2982
          %2985 = dma.done %s2980, 4096
        $region64: #{tpu_custom_call.1} parent=59 // pred_fallthru
          _
      $region60: #{tpu_custom_call.1} parent=5 // pred_fallthru
        _
    $region6: #{tpu_custom_call.1} parent=1 // loop_footer
      %s22 = sadd.s32 1, %s18
    $region7: #{tpu_custom_call.1} parent=1 // loop_footer_branch
      %17 = sbr.rel target = $region3
    $region8: #{tpu_custom_call.1} parent=1 // loop_exit
      _
    %2986 = vsyncpa [#allocation7], 1
    %s2987 = scalar_lea.sflag [#allocation7], 1
    %2988 = vsyncpa %s2987, 1
    %2989 = vsyncpa [#allocation10], 1
    %s2990 = scalar_lea.sflag [#allocation10], 1
    %2991 = vsyncpa %s2990, 1
    %2992 = vsyncpa [#allocation8], 1
    %s2993 = scalar_lea.sflag [#allocation8], 1
    %2994 = vsyncpa %s2993, 1

</llo_original>
